<compile_context>
chip_gen: v7x
topology: tpu7x:2x2x1
jax: 0.10.0
libtpu: 0.0.40
codegen_flags: <defaults>
</compile_context>

<pallas_src>
import functools
import math

import numpy as np
import jax
import jax.numpy as jnp
from jax.experimental import pallas as pl
from jax.experimental.pallas import tpu as pltpu

# Dynamics constants (module-level globals in the reference script).
T = 8
DT = 1.0
TAU_M = 10.0
LM = math.exp(-DT / TAU_M)          # lm = exp(-dt / tau_m)

LANES = 128                         # lane-dense output width (f32 vreg lanes)
SUBLANES = 8                        # f32 sublane tile


def rate_rnn_kernel(spk_ref, win_t_ref, wr_t_ref, wout_pad_ref, out_ref, *, out_dim):
    """Single invocation; all operands resident in VMEM.

    spk_ref      : (T*B_pad, IN)   spike train, time-major rows, batch padded to 8
    win_t_ref    : (IN, H)         Win.T
    wr_t_ref     : (H, H)          Wr.T   (Wr = (l * pin) @ pout.T, built once in prep)
    wout_pad_ref : (H, 128)        Wout.T zero-padded to lane-dense width
    out_ref      : (B_pad, 128)    softmax output (padded lanes = 0)
    """
    B_pad, _ = out_ref.shape
    H = wr_t_ref.shape[0]
    n_steps = spk_ref.shape[0] // B_pad

    # Hoisted input projection: one (T*B_pad, IN) @ (IN, H) matmul for all steps.
    # TODO(synk): casting spk/Win.T to bf16 here halves the only non-trivial VMEM
    # footprint and runs the MXU at native bf16 rate; only worth it once B scales.
    iin = jnp.dot(spk_ref[...], win_t_ref[...],
                  preferred_element_type=jnp.float32)            # (T*B_pad, H)
    wr_t = wr_t_ref[...]                                         # (H, H)

    # Recurrent state lives in vregs (tiny: (B_pad, H) f32).
    mem = jnp.zeros((B_pad, H), jnp.float32)
    r = jnp.zeros((B_pad, H), jnp.float32)                       # tanh(0) = 0
    rm = jnp.full((B_pad, H), -jnp.inf, jnp.float32)

    # T is small & static -> fully unrolled loop, LLO sees the whole schedule.
    # Per-step slices are sublane-aligned (B_pad multiple of 8).
    # TODO(synk): on v5e/v6e the rank-4 factorized update (r@pout, *l, @pin.T on
    # the VPU) would remove 8 serial MXU MRF round-trips; benchmark both forms.
    for t in range(n_steps):
        cur = (iin[t * B_pad:(t + 1) * B_pad, :]
               + jnp.dot(r, wr_t, preferred_element_type=jnp.float32))
        mem = LM * mem + (1.0 - LM) * cur
        r = jnp.tanh(mem)                    # computed once, reused twice
        rm = jnp.maximum(rm, r)              # running max of firing rate

    # Lane-dense logits: (B_pad, 128); mask padded classes to -inf before softmax.
    logits = jnp.dot(rm, wout_pad_ref[...],
                     preferred_element_type=jnp.float32)         # (B_pad, 128)
    lane = jax.lax.broadcasted_iota(jnp.int32, logits.shape, 1)
    logits = jnp.where(lane < out_dim, logits, -jnp.inf)

    m = jnp.max(logits, axis=-1, keepdims=True)
    e = jnp.exp(logits - m)                                      # padded lanes -> 0
    s = jnp.sum(e, axis=-1, keepdims=True)
    # Exact reciprocal (approx=False) keeps the sum-to-1 check at atol=1e-5.
    out_ref[...] = e * pl.reciprocal(s)


def prepare_params(Win, Wout, pin, pout, l):
    """One-off weight prep (cache the result; weights don't change per batch)."""
    Win = jnp.asarray(Win, jnp.float32)
    Wout = jnp.asarray(Wout, jnp.float32)
    pin = jnp.asarray(pin, jnp.float32)
    pout = jnp.asarray(pout, jnp.float32)
    l = jnp.asarray(l, jnp.float32)

    OUT, H = Wout.shape
    wr_t = ((l * pin) @ pout.T).T                                # (H, H)  Wr.T
    win_t = Win.T                                                # (IN, H)
    wout_pad = jnp.zeros((H, LANES), jnp.float32).at[:, :OUT].set(Wout.T)
    return win_t, wr_t, wout_pad, OUT


@functools.partial(jax.jit, static_argnames=("out_dim",))
def rate_rnn_forward(spk, win_t, wr_t, wout_pad, *, out_dim):
    """spk: (T, B, IN) float32 spike train; returns softmax probs (B, out_dim)."""
    Tn, B, IN = spk.shape
    B_pad = ((B + SUBLANES - 1) // SUBLANES) * SUBLANES          # sublane-align batch

    spk = jnp.asarray(spk, jnp.float32)
    if B_pad != B:
        spk = jnp.pad(spk, ((0, 0), (0, B_pad - B), (0, 0)))     # zero rows stay inert
    spk2d = spk.reshape(Tn * B_pad, IN)

    vmem = pl.BlockSpec(memory_space=pltpu.MemorySpace.VMEM)
    # TODO(synk): if B is ever scaled up, add a "parallel" batch grid axis
    # (v7x 2nd TensorCore) and batch-tile spk via BlockSpec to stay under v7x's
    # 64 MiB VMEM / default scoped-VMEM limits and pipeline the spk DMA.
    out_pad = pl.pallas_call(
        functools.partial(rate_rnn_kernel, out_dim=out_dim),
        out_shape=jax.ShapeDtypeStruct((B_pad, LANES), jnp.float32),
        in_specs=[vmem, vmem, vmem, vmem],
        out_specs=vmem,
    )(spk2d, win_t, wr_t, wout_pad)
    return out_pad[:B, :out_dim]


def reference_forward(spk, Win, Wout, pin, pout, l):
    """Pure-JAX reference mirroring the PyTorch forward (mdl=1 branch)."""
    Wr = (l * pin) @ pout.T
    _, B, _ = spk.shape
    H = pin.shape[0]
    mem = jnp.zeros((B, H), jnp.float32)
    rm = jnp.full((B, H), -jnp.inf, jnp.float32)
    for i in range(spk.shape[0]):
        cur = spk[i] @ Win.T + jnp.tanh(mem) @ Wr.T
        mem = LM * mem + (1.0 - LM) * cur
        rm = jnp.maximum(rm, jnp.tanh(mem))
    rout = rm @ Wout.T
    return jax.nn.softmax(rout, axis=-1)


if __name__ == "__main__":
    # Small, MNIST-consistent shapes: forward() hardcodes 784 input pixels.
    B, IN, H, OUT, P = 2, 784, 32, 10, 4

    key = jax.random.PRNGKey(0)
    k_img, k_spk, k_win, k_wout, k_pin, k_pout, k_l = jax.random.split(key, 7)

    # Parameters, initialized as in rate_RNN_mnist.initialize().
    Win = jax.random.normal(k_win, (H, IN), jnp.float32) / np.sqrt(H)
    Wout = jax.random.normal(k_wout, (OUT, H), jnp.float32) / np.sqrt(H)
    pin = jax.random.normal(k_pin, (H, P), jnp.float32) / np.sqrt(P)
    pout = jax.random.normal(k_pout, (H, P), jnp.float32) / np.sqrt(P)
    l = jax.random.normal(k_l, (P,), jnp.float32) * (np.sqrt(P) / np.sqrt(H))

    # Input images in [0, 1] and deterministic Bernoulli rate coding
    # (== snntorch.spikegen.rate, but with a fixed JAX PRNG key).
    inputs = jax.random.uniform(k_img, (B, IN), jnp.float32)
    spk = (jax.random.uniform(k_spk, (T, B, IN), jnp.float32)
           < inputs[None]).astype(jnp.float32)

    # One-off cached weight prep, then a single jitted forward call.
    win_t, wr_t, wout_pad, out_dim = prepare_params(Win, Wout, pin, pout, l)
    win_t, wr_t, wout_pad = jax.block_until_ready((win_t, wr_t, wout_pad))

    out = rate_rnn_forward(spk, win_t, wr_t, wout_pad, out_dim=out_dim)
    out = jax.block_until_ready(out)

    ref = reference_forward(spk, Win, Wout, pin, pout, l)
    np.testing.assert_allclose(np.asarray(out), np.asarray(ref),
                               rtol=1e-3, atol=1e-3)
    assert out.shape == (B, OUT)
    np.testing.assert_allclose(np.asarray(out).sum(axis=-1), 1.0, atol=1e-5)

    print("KERNEL_OK")
</pallas_src>

<mosaic_0001>
module attributes {stable_mosaic.version = 11 : i64} {
  func.func @rate_rnn_kernel(%arg0: memref<64x784xf32, #tpu.memory_space<vmem>>, %arg1: memref<784x32xf32, #tpu.memory_space<vmem>>, %arg2: memref<32x32xf32, #tpu.memory_space<vmem>>, %arg3: memref<32x128xf32, #tpu.memory_space<vmem>>, %arg4: memref<8x128xf32, #tpu.memory_space<vmem>>) attributes {dimension_semantics = [], scalar_prefetch = 0 : i64, scratch_operands = 0 : i64, tpu.core_type = #tpu.core_type<tc>} {
    %c0 = arith.constant 0 : index
    %c0_0 = arith.constant 0 : index
    %0 = vector.load %arg0[%c0, %c0_0] : memref<64x784xf32, #tpu.memory_space<vmem>>, vector<64x784xf32>
    %c0_1 = arith.constant 0 : index
    %c0_2 = arith.constant 0 : index
    %1 = vector.load %arg1[%c0_1, %c0_2] : memref<784x32xf32, #tpu.memory_space<vmem>>, vector<784x32xf32>
    %cst = arith.constant dense<0.000000e+00> : vector<64x32xf32>
    %2 = tpu.matmul %0, %1, %cst {dimension_numbers = #tpu.dot_dimension_numbers<[1], [0], [0], [1], [0, 0, 1, 1], [], []>} : vector<64x784xf32>, vector<784x32xf32>, vector<64x32xf32> -> vector<64x32xf32>
    %c0_3 = arith.constant 0 : index
    %c0_4 = arith.constant 0 : index
    %3 = vector.load %arg2[%c0_3, %c0_4] : memref<32x32xf32, #tpu.memory_space<vmem>>, vector<32x32xf32>
    %cst_5 = arith.constant 0.000000e+00 : f32
    %4 = vector.broadcast %cst_5 : f32 to vector<8x32xf32>
    %cst_6 = arith.constant 0.000000e+00 : f32
    %5 = vector.broadcast %cst_6 : f32 to vector<8x32xf32>
    %cst_7 = arith.constant 0xFF800000 : f32
    %6 = vector.broadcast %cst_7 : f32 to vector<8x32xf32>
    %7 = vector.extract_strided_slice %2 {offsets = [0, 0], sizes = [8, 32], strides = [1, 1]} : vector<64x32xf32> to vector<8x32xf32>
    %cst_8 = arith.constant dense<0.000000e+00> : vector<8x32xf32>
    %8 = tpu.matmul %5, %3, %cst_8 {dimension_numbers = #tpu.dot_dimension_numbers<[1], [0], [0], [1], [0, 0, 1, 1], [], []>} : vector<8x32xf32>, vector<32x32xf32>, vector<8x32xf32> -> vector<8x32xf32>
    %9 = arith.addf %7, %8 : vector<8x32xf32>
    %cst_9 = arith.constant 0.904837429 : f32
    %10 = vector.broadcast %cst_9 : f32 to vector<8x32xf32>
    %11 = arith.mulf %10, %4 : vector<8x32xf32>
    %cst_10 = arith.constant 0.0951625854 : f32
    %12 = vector.broadcast %cst_10 : f32 to vector<8x32xf32>
    %13 = arith.mulf %12, %9 : vector<8x32xf32>
    %14 = arith.addf %11, %13 : vector<8x32xf32>
    %15 = math.tanh %14 : vector<8x32xf32>
    %16 = arith.maximumf %6, %15 : vector<8x32xf32>
    %17 = vector.extract_strided_slice %2 {offsets = [8, 0], sizes = [8, 32], strides = [1, 1]} : vector<64x32xf32> to vector<8x32xf32>
    %cst_11 = arith.constant dense<0.000000e+00> : vector<8x32xf32>
    %18 = tpu.matmul %15, %3, %cst_11 {dimension_numbers = #tpu.dot_dimension_numbers<[1], [0], [0], [1], [0, 0, 1, 1], [], []>} : vector<8x32xf32>, vector<32x32xf32>, vector<8x32xf32> -> vector<8x32xf32>
    %19 = arith.addf %17, %18 : vector<8x32xf32>
    %cst_12 = arith.constant 0.904837429 : f32
    %20 = vector.broadcast %cst_12 : f32 to vector<8x32xf32>
    %21 = arith.mulf %20, %14 : vector<8x32xf32>
    %cst_13 = arith.constant 0.0951625854 : f32
    %22 = vector.broadcast %cst_13 : f32 to vector<8x32xf32>
    %23 = arith.mulf %22, %19 : vector<8x32xf32>
    %24 = arith.addf %21, %23 : vector<8x32xf32>
    %25 = math.tanh %24 : vector<8x32xf32>
    %26 = arith.maximumf %16, %25 : vector<8x32xf32>
    %27 = vector.extract_strided_slice %2 {offsets = [16, 0], sizes = [8, 32], strides = [1, 1]} : vector<64x32xf32> to vector<8x32xf32>
    %cst_14 = arith.constant dense<0.000000e+00> : vector<8x32xf32>
    %28 = tpu.matmul %25, %3, %cst_14 {dimension_numbers = #tpu.dot_dimension_numbers<[1], [0], [0], [1], [0, 0, 1, 1], [], []>} : vector<8x32xf32>, vector<32x32xf32>, vector<8x32xf32> -> vector<8x32xf32>
    %29 = arith.addf %27, %28 : vector<8x32xf32>
    %cst_15 = arith.constant 0.904837429 : f32
    %30 = vector.broadcast %cst_15 : f32 to vector<8x32xf32>
    %31 = arith.mulf %30, %24 : vector<8x32xf32>
    %cst_16 = arith.constant 0.0951625854 : f32
    %32 = vector.broadcast %cst_16 : f32 to vector<8x32xf32>
    %33 = arith.mulf %32, %29 : vector<8x32xf32>
    %34 = arith.addf %31, %33 : vector<8x32xf32>
    %35 = math.tanh %34 : vector<8x32xf32>
    %36 = arith.maximumf %26, %35 : vector<8x32xf32>
    %37 = vector.extract_strided_slice %2 {offsets = [24, 0], sizes = [8, 32], strides = [1, 1]} : vector<64x32xf32> to vector<8x32xf32>
    %cst_17 = arith.constant dense<0.000000e+00> : vector<8x32xf32>
    %38 = tpu.matmul %35, %3, %cst_17 {dimension_numbers = #tpu.dot_dimension_numbers<[1], [0], [0], [1], [0, 0, 1, 1], [], []>} : vector<8x32xf32>, vector<32x32xf32>, vector<8x32xf32> -> vector<8x32xf32>
    %39 = arith.addf %37, %38 : vector<8x32xf32>
    %cst_18 = arith.constant 0.904837429 : f32
    %40 = vector.broadcast %cst_18 : f32 to vector<8x32xf32>
    %41 = arith.mulf %40, %34 : vector<8x32xf32>
    %cst_19 = arith.constant 0.0951625854 : f32
    %42 = vector.broadcast %cst_19 : f32 to vector<8x32xf32>
    %43 = arith.mulf %42, %39 : vector<8x32xf32>
    %44 = arith.addf %41, %43 : vector<8x32xf32>
    %45 = math.tanh %44 : vector<8x32xf32>
    %46 = arith.maximumf %36, %45 : vector<8x32xf32>
    %47 = vector.extract_strided_slice %2 {offsets = [32, 0], sizes = [8, 32], strides = [1, 1]} : vector<64x32xf32> to vector<8x32xf32>
    %cst_20 = arith.constant dense<0.000000e+00> : vector<8x32xf32>
    %48 = tpu.matmul %45, %3, %cst_20 {dimension_numbers = #tpu.dot_dimension_numbers<[1], [0], [0], [1], [0, 0, 1, 1], [], []>} : vector<8x32xf32>, vector<32x32xf32>, vector<8x32xf32> -> vector<8x32xf32>
    %49 = arith.addf %47, %48 : vector<8x32xf32>
    %cst_21 = arith.constant 0.904837429 : f32
    %50 = vector.broadcast %cst_21 : f32 to vector<8x32xf32>
    %51 = arith.mulf %50, %44 : vector<8x32xf32>
    %cst_22 = arith.constant 0.0951625854 : f32
    %52 = vector.broadcast %cst_22 : f32 to vector<8x32xf32>
    %53 = arith.mulf %52, %49 : vector<8x32xf32>
    %54 = arith.addf %51, %53 : vector<8x32xf32>
    %55 = math.tanh %54 : vector<8x32xf32>
    %56 = arith.maximumf %46, %55 : vector<8x32xf32>
    %57 = vector.extract_strided_slice %2 {offsets = [40, 0], sizes = [8, 32], strides = [1, 1]} : vector<64x32xf32> to vector<8x32xf32>
    %cst_23 = arith.constant dense<0.000000e+00> : vector<8x32xf32>
    %58 = tpu.matmul %55, %3, %cst_23 {dimension_numbers = #tpu.dot_dimension_numbers<[1], [0], [0], [1], [0, 0, 1, 1], [], []>} : vector<8x32xf32>, vector<32x32xf32>, vector<8x32xf32> -> vector<8x32xf32>
    %59 = arith.addf %57, %58 : vector<8x32xf32>
    %cst_24 = arith.constant 0.904837429 : f32
    %60 = vector.broadcast %cst_24 : f32 to vector<8x32xf32>
    %61 = arith.mulf %60, %54 : vector<8x32xf32>
    %cst_25 = arith.constant 0.0951625854 : f32
    %62 = vector.broadcast %cst_25 : f32 to vector<8x32xf32>
    %63 = arith.mulf %62, %59 : vector<8x32xf32>
    %64 = arith.addf %61, %63 : vector<8x32xf32>
    %65 = math.tanh %64 : vector<8x32xf32>
    %66 = arith.maximumf %56, %65 : vector<8x32xf32>
    %67 = vector.extract_strided_slice %2 {offsets = [48, 0], sizes = [8, 32], strides = [1, 1]} : vector<64x32xf32> to vector<8x32xf32>
    %cst_26 = arith.constant dense<0.000000e+00> : vector<8x32xf32>
    %68 = tpu.matmul %65, %3, %cst_26 {dimension_numbers = #tpu.dot_dimension_numbers<[1], [0], [0], [1], [0, 0, 1, 1], [], []>} : vector<8x32xf32>, vector<32x32xf32>, vector<8x32xf32> -> vector<8x32xf32>
    %69 = arith.addf %67, %68 : vector<8x32xf32>
    %cst_27 = arith.constant 0.904837429 : f32
    %70 = vector.broadcast %cst_27 : f32 to vector<8x32xf32>
    %71 = arith.mulf %70, %64 : vector<8x32xf32>
    %cst_28 = arith.constant 0.0951625854 : f32
    %72 = vector.broadcast %cst_28 : f32 to vector<8x32xf32>
    %73 = arith.mulf %72, %69 : vector<8x32xf32>
    %74 = arith.addf %71, %73 : vector<8x32xf32>
    %75 = math.tanh %74 : vector<8x32xf32>
    %76 = arith.maximumf %66, %75 : vector<8x32xf32>
    %77 = vector.extract_strided_slice %2 {offsets = [56, 0], sizes = [8, 32], strides = [1, 1]} : vector<64x32xf32> to vector<8x32xf32>
    %cst_29 = arith.constant dense<0.000000e+00> : vector<8x32xf32>
    %78 = tpu.matmul %75, %3, %cst_29 {dimension_numbers = #tpu.dot_dimension_numbers<[1], [0], [0], [1], [0, 0, 1, 1], [], []>} : vector<8x32xf32>, vector<32x32xf32>, vector<8x32xf32> -> vector<8x32xf32>
    %79 = arith.addf %77, %78 : vector<8x32xf32>
    %cst_30 = arith.constant 0.904837429 : f32
    %80 = vector.broadcast %cst_30 : f32 to vector<8x32xf32>
    %81 = arith.mulf %80, %74 : vector<8x32xf32>
    %cst_31 = arith.constant 0.0951625854 : f32
    %82 = vector.broadcast %cst_31 : f32 to vector<8x32xf32>
    %83 = arith.mulf %82, %79 : vector<8x32xf32>
    %84 = arith.addf %81, %83 : vector<8x32xf32>
    %85 = math.tanh %84 : vector<8x32xf32>
    %86 = arith.maximumf %76, %85 : vector<8x32xf32>
    %c0_32 = arith.constant 0 : index
    %c0_33 = arith.constant 0 : index
    %87 = vector.load %arg3[%c0_32, %c0_33] : memref<32x128xf32, #tpu.memory_space<vmem>>, vector<32x128xf32>
    %cst_34 = arith.constant dense<0.000000e+00> : vector<8x128xf32>
    %88 = tpu.matmul %86, %87, %cst_34 {dimension_numbers = #tpu.dot_dimension_numbers<[1], [0], [0], [1], [0, 0, 1, 1], [], []>} : vector<8x32xf32>, vector<32x128xf32>, vector<8x128xf32> -> vector<8x128xf32>
    %89 = tpu.iota {dimensions = array<i32: 1>} : vector<8x128xi32>
    %c10_i32 = arith.constant 10 : i32
    %90 = vector.broadcast %c10_i32 : i32 to vector<8x128xi32>
    %91 = arith.cmpi slt, %89, %90 : vector<8x128xi32>
    %cst_35 = arith.constant 0xFF800000 : f32
    %92 = vector.broadcast %cst_35 : f32 to vector<8x128xf32>
    %93 = arith.select %91, %88, %92 : vector<8x128xi1>, vector<8x128xf32>
    %cst_36 = arith.constant dense<0xFF800000> : vector<8xf32>
    %94 = vector.multi_reduction <maximumf>, %93, %cst_36 [1] : vector<8x128xf32> to vector<8xf32>
    %95 = vector.shape_cast %94 : vector<8xf32> to vector<8x1xf32>
    %96 = vector.broadcast %95 : vector<8x1xf32> to vector<8x128xf32>
    %97 = arith.subf %93, %96 : vector<8x128xf32>
    %98 = math.exp %97 : vector<8x128xf32>
    %cst_37 = arith.constant dense<0.000000e+00> : vector<8xf32>
    %99 = vector.multi_reduction <add>, %98, %cst_37 [1] : vector<8x128xf32> to vector<8xf32>
    %100 = vector.shape_cast %99 : vector<8xf32> to vector<8x1xf32>
    %101 = tpu.reciprocal %100 : vector<8x1xf32> -> vector<8x1xf32>
    %102 = vector.broadcast %101 : vector<8x1xf32> to vector<8x128xf32>
    %103 = arith.mulf %98, %102 : vector<8x128xf32>
    %c0_38 = arith.constant 0 : index
    %c0_39 = arith.constant 0 : index
    %104 = vector.load %arg4[%c0_38, %c0_39] : memref<8x128xf32, #tpu.memory_space<vmem>>, vector<8x128xf32>
    tpu.vector_store %arg4[%c0_38, %c0_39], %103 {strides = array<i32>} : memref<8x128xf32, #tpu.memory_space<vmem>>, vector<8x128xf32>,
    return
  }
}

</mosaic_0001>

<llo_original>
// kernel: rate_rnn_forward.1
$region0: #{rate_rnn_forward.1}
  #allocation0 [shape = 'u32[]', space=smem, size = 0x4, offset = 0x4, fixed_abs, tag = 'smem constant byte address 0x4 - core index']
  #allocation1 [shape = 'u32[144,128]{1,0:T(1,128)}', space=vmem, size = 0x12000, scoped, tag = 'internal scratch']
  %s0 = inlined_call_operand.vmem [shape: f32[64,784], index: 0, kind: input, shape index: {}]
  %s1 = inlined_call_operand.vmem [shape: f32[784,32], index: 1, kind: input, shape index: {}]
  %s2 = inlined_call_operand.vmem [shape: f32[32,32], index: 2, kind: input, shape index: {}]
  %s3 = inlined_call_operand.vmem [shape: f32[32,128], index: 3, kind: input, shape index: {}]
  %s4 = inlined_call_operand.vmem [shape: f32[8,128], index: 4, kind: output, shape index: {}]
  %s5 = sld [smem:[#allocation0]]
  $region26: #{rate_rnn_forward.1} parent=0
    _
  %s7 = ssub.s32 1, %s5
  %s8 = scalar_select 0, %s7, %s5
  // Predicated region
  $region2: #{rate_rnn_forward.1} parent=0 // pred_check
    _
  $region3: #{rate_rnn_forward.1} parent=0 // pred_check_branch
    %10 = sbr.rel (0) target = $region5
  $region4: #{rate_rnn_forward.1} parent=0 // pred_region
    _
  $region5: #{rate_rnn_forward.1} parent=0 // pred_fallthru
    _
  // Predicated region
  $region6: #{rate_rnn_forward.1} parent=0 // pred_check
    _
  $region7: #{rate_rnn_forward.1} parent=0 // pred_check_branch
    %12 = sbr.rel (0) target = $region9
  $region8: #{rate_rnn_forward.1} parent=0 // pred_region
    _
  $region9: #{rate_rnn_forward.1} parent=0 // pred_fallthru
    _
  // Predicated region
  $region10: #{rate_rnn_forward.1} parent=0 // pred_check
    _
  $region11: #{rate_rnn_forward.1} parent=0 // pred_check_branch
    %14 = sbr.rel (0) target = $region13
  $region12: #{rate_rnn_forward.1} parent=0 // pred_region
    _
  $region13: #{rate_rnn_forward.1} parent=0 // pred_fallthru
    _
  // Predicated region
  $region14: #{rate_rnn_forward.1} parent=0 // pred_check
    _
  $region15: #{rate_rnn_forward.1} parent=0 // pred_check_branch
    %16 = sbr.rel (0) target = $region17
  $region16: #{rate_rnn_forward.1} parent=0 // pred_region
    _
  $region17: #{rate_rnn_forward.1} parent=0 // pred_fallthru
    _
  %v17 = vld [vmem:[%s0] sm:$0xff]
  %v18 = vld [vmem:[%s0 + $0x8] sm:$0xff]
  %v19 = vld [vmem:[%s0 + $0x10] sm:$0xff]
  %v20 = vld [vmem:[%s0 + $0x18] sm:$0xff]
  %v21 = vld [vmem:[%s0 + $0x20] sm:$0xff]
  %v22 = vld [vmem:[%s0 + $0x28] sm:$0xff]
  %v23 = vld [vmem:[%s0 + $0x30] sm:$0xff]
  %v24 = vld [vmem:[%s0 + $0x38] sm:$0xff]
  %v25 = vld [vmem:[%s0 + $0x40] sm:$0xff]
  %v26 = vld [vmem:[%s0 + $0x48] sm:$0xff]
  %v27 = vld [vmem:[%s0 + $0x50] sm:$0xff]
  %v28 = vld [vmem:[%s0 + $0x58] sm:$0xff]
  %v29 = vld [vmem:[%s0 + $0x60] sm:$0xff]
  %v30 = vld [vmem:[%s0 + $0x68] sm:$0xff]
  %v31 = vld [vmem:[%s0 + $0x70] sm:$0xff]
  %v32 = vld [vmem:[%s0 + $0x78] sm:$0xff]
  %v33 = vld [vmem:[%s0 + $0x80] sm:$0xff]
  %v34 = vld [vmem:[%s0 + $0x88] sm:$0xff]
  %v35 = vld [vmem:[%s0 + $0x90] sm:$0xff]
  %v36 = vld [vmem:[%s0 + $0x98] sm:$0xff]
  %v37 = vld [vmem:[%s0 + $0xa0] sm:$0xff]
  %v38 = vld [vmem:[%s0 + $0xa8] sm:$0xff]
  %v39 = vld [vmem:[%s0 + $0xb0] sm:$0xff]
  %v40 = vld [vmem:[%s0 + $0xb8] sm:$0xff]
  %v41 = vld [vmem:[%s0 + $0xc0] sm:$0xff]
  %v42 = vld [vmem:[%s0 + $0xc8] sm:$0xff]
  %v43 = vld [vmem:[%s0 + $0xd0] sm:$0xff]
  %v44 = vld [vmem:[%s0 + $0xd8] sm:$0xff]
  %v45 = vld [vmem:[%s0 + $0xe0] sm:$0xff]
  %v46 = vld [vmem:[%s0 + $0xe8] sm:$0xff]
  %v47 = vld [vmem:[%s0 + $0xf0] sm:$0xff]
  %v48 = vld [vmem:[%s0 + $0xf8] sm:$0xff]
  %v49 = vld [vmem:[%s0 + $0x100] sm:$0xff]
  %v50 = vld [vmem:[%s0 + $0x108] sm:$0xff]
  %v51 = vld [vmem:[%s0 + $0x110] sm:$0xff]
  %v52 = vld [vmem:[%s0 + $0x118] sm:$0xff]
  %v53 = vld [vmem:[%s0 + $0x120] sm:$0xff]
  %v54 = vld [vmem:[%s0 + $0x128] sm:$0xff]
  %v55 = vld [vmem:[%s0 + $0x130] sm:$0xff]
  %v56 = vld [vmem:[%s0 + $0x138] sm:$0xff]
  %v57 = vld [vmem:[%s0 + $0x140] sm:$0xff]
  %v58 = vld [vmem:[%s0 + $0x148] sm:$0xff]
  %v59 = vld [vmem:[%s0 + $0x150] sm:$0xff]
  %v60 = vld [vmem:[%s0 + $0x158] sm:$0xff]
  %v61 = vld [vmem:[%s0 + $0x160] sm:$0xff]
  %v62 = vld [vmem:[%s0 + $0x168] sm:$0xff]
  %v63 = vld [vmem:[%s0 + $0x170] sm:$0xff]
  %v64 = vld [vmem:[%s0 + $0x178] sm:$0xff]
  %v65 = vld [vmem:[%s0 + $0x180] sm:$0xff]
  %v66 = vld [vmem:[%s0 + $0x188] sm:$0xff]
  %v67 = vld [vmem:[%s0 + $0x190] sm:$0xff]
  %v68 = vld [vmem:[%s0 + $0x198] sm:$0xff]
  %v69 = vld [vmem:[%s0 + $0x1a0] sm:$0xff]
  %v70 = vld [vmem:[%s0 + $0x1a8] sm:$0xff]
  %v71 = vld [vmem:[%s0 + $0x1b0] sm:$0xff]
  %v72 = vld [vmem:[%s0 + $0x1b8] sm:$0xff]
  %v73 = vld [vmem:[%s1] sm:$0xff]
  %v74 = vld [vmem:[%s1 + $0x8] sm:$0xff]
  %v75 = vld [vmem:[%s1 + $0x10] sm:$0xff]
  %v76 = vld [vmem:[%s1 + $0x18] sm:$0xff]
  %v77 = vld [vmem:[%s1 + $0x20] sm:$0xff]
  %v78 = vld [vmem:[%s1 + $0x28] sm:$0xff]
  %v79 = vld [vmem:[%s1 + $0x30] sm:$0xff]
  %v80 = vld [vmem:[%s1 + $0x38] sm:$0xff]
  %v81 = vld [vmem:[%s1 + $0x40] sm:$0xff]
  %v82 = vld [vmem:[%s1 + $0x48] sm:$0xff]
  %v83 = vld [vmem:[%s1 + $0x50] sm:$0xff]
  %v84 = vld [vmem:[%s1 + $0x58] sm:$0xff]
  %v85 = vld [vmem:[%s1 + $0x60] sm:$0xff]
  %v86 = vld [vmem:[%s1 + $0x68] sm:$0xff]
  %v87 = vld [vmem:[%s1 + $0x70] sm:$0xff]
  %v88 = vld [vmem:[%s1 + $0x78] sm:$0xff]
  %v89 = vld [vmem:[%s1 + $0x80] sm:$0xff]
  %v90 = vld [vmem:[%s1 + $0x88] sm:$0xff]
  %v91 = vld [vmem:[%s1 + $0x90] sm:$0xff]
  %v92 = vld [vmem:[%s1 + $0x98] sm:$0xff]
  %v93 = vld [vmem:[%s1 + $0xa0] sm:$0xff]
  %v94 = vld [vmem:[%s1 + $0xa8] sm:$0xff]
  %v95 = vld [vmem:[%s1 + $0xb0] sm:$0xff]
  %v96 = vld [vmem:[%s1 + $0xb8] sm:$0xff]
  %v97 = vld [vmem:[%s1 + $0xc0] sm:$0xff]
  %v98 = vld [vmem:[%s1 + $0xc8] sm:$0xff]
  %v99 = vld [vmem:[%s1 + $0xd0] sm:$0xff]
  %v100 = vld [vmem:[%s1 + $0xd8] sm:$0xff]
  %v101 = vld [vmem:[%s1 + $0xe0] sm:$0xff]
  %v102 = vld [vmem:[%s1 + $0xe8] sm:$0xff]
  %v103 = vld [vmem:[%s1 + $0xf0] sm:$0xff]
  %v104 = vld [vmem:[%s1 + $0xf8] sm:$0xff]
  %v105 = vld [vmem:[%s1 + $0x100] sm:$0xff]
  %v106 = vld [vmem:[%s1 + $0x108] sm:$0xff]
  %v107 = vld [vmem:[%s1 + $0x110] sm:$0xff]
  %v108 = vld [vmem:[%s1 + $0x118] sm:$0xff]
  %v109 = vld [vmem:[%s1 + $0x120] sm:$0xff]
  %v110 = vld [vmem:[%s1 + $0x128] sm:$0xff]
  %v111 = vld [vmem:[%s1 + $0x130] sm:$0xff]
  %v112 = vld [vmem:[%s1 + $0x138] sm:$0xff]
  %v113 = vld [vmem:[%s1 + $0x140] sm:$0xff]
  %v114 = vld [vmem:[%s1 + $0x148] sm:$0xff]
  %v115 = vld [vmem:[%s1 + $0x150] sm:$0xff]
  %v116 = vld [vmem:[%s1 + $0x158] sm:$0xff]
  %v117 = vld [vmem:[%s1 + $0x160] sm:$0xff]
  %v118 = vld [vmem:[%s1 + $0x168] sm:$0xff]
  %v119 = vld [vmem:[%s1 + $0x170] sm:$0xff]
  %v120 = vld [vmem:[%s1 + $0x178] sm:$0xff]
  %v121 = vld [vmem:[%s1 + $0x180] sm:$0xff]
  %v122 = vld [vmem:[%s1 + $0x188] sm:$0xff]
  %v123 = vld [vmem:[%s1 + $0x190] sm:$0xff]
  %v124 = vld [vmem:[%s1 + $0x198] sm:$0xff]
  %v125 = vld [vmem:[%s1 + $0x1a0] sm:$0xff]
  %v126 = vld [vmem:[%s1 + $0x1a8] sm:$0xff]
  %v127 = vld [vmem:[%s1 + $0x1b0] sm:$0xff]
  %v128 = vld [vmem:[%s1 + $0x1b8] sm:$0xff]
  %v129 = vld [vmem:[%s1 + $0x1c0] sm:$0xff]
  %v130 = vld [vmem:[%s1 + $0x1c8] sm:$0xff]
  %v131 = vld [vmem:[%s1 + $0x1d0] sm:$0xff]
  %v132 = vld [vmem:[%s1 + $0x1d8] sm:$0xff]
  %v133 = vld [vmem:[%s1 + $0x1e0] sm:$0xff]
  %v134 = vld [vmem:[%s1 + $0x1e8] sm:$0xff]
  %v135 = vld [vmem:[%s1 + $0x1f0] sm:$0xff]
  %v136 = vld [vmem:[%s1 + $0x1f8] sm:$0xff]
  %v137 = vld [vmem:[%s1 + $0x200] sm:$0xff]
  %v138 = vld [vmem:[%s1 + $0x208] sm:$0xff]
  %v139 = vld [vmem:[%s1 + $0x210] sm:$0xff]
  %v140 = vld [vmem:[%s1 + $0x218] sm:$0xff]
  %v141 = vld [vmem:[%s1 + $0x220] sm:$0xff]
  %v142 = vld [vmem:[%s1 + $0x228] sm:$0xff]
  %v143 = vld [vmem:[%s1 + $0x230] sm:$0xff]
  %v144 = vld [vmem:[%s1 + $0x238] sm:$0xff]
  %v145 = vld [vmem:[%s1 + $0x240] sm:$0xff]
  %v146 = vld [vmem:[%s1 + $0x248] sm:$0xff]
  %v147 = vld [vmem:[%s1 + $0x250] sm:$0xff]
  %v148 = vld [vmem:[%s1 + $0x258] sm:$0xff]
  %v149 = vld [vmem:[%s1 + $0x260] sm:$0xff]
  %v150 = vld [vmem:[%s1 + $0x268] sm:$0xff]
  %v151 = vld [vmem:[%s1 + $0x270] sm:$0xff]
  %v152 = vld [vmem:[%s1 + $0x278] sm:$0xff]
  %v153 = vld [vmem:[%s1 + $0x280] sm:$0xff]
  %v154 = vld [vmem:[%s1 + $0x288] sm:$0xff]
  %v155 = vld [vmem:[%s1 + $0x290] sm:$0xff]
  %v156 = vld [vmem:[%s1 + $0x298] sm:$0xff]
  %v157 = vld [vmem:[%s1 + $0x2a0] sm:$0xff]
  %v158 = vld [vmem:[%s1 + $0x2a8] sm:$0xff]
  %v159 = vld [vmem:[%s1 + $0x2b0] sm:$0xff]
  %v160 = vld [vmem:[%s1 + $0x2b8] sm:$0xff]
  %v161 = vld [vmem:[%s1 + $0x2c0] sm:$0xff]
  %v162 = vld [vmem:[%s1 + $0x2c8] sm:$0xff]
  %v163 = vld [vmem:[%s1 + $0x2d0] sm:$0xff]
  %v164 = vld [vmem:[%s1 + $0x2d8] sm:$0xff]
  %v165 = vld [vmem:[%s1 + $0x2e0] sm:$0xff]
  %v166 = vld [vmem:[%s1 + $0x2e8] sm:$0xff]
  %v167 = vld [vmem:[%s1 + $0x2f0] sm:$0xff]
  %v168 = vld [vmem:[%s1 + $0x2f8] sm:$0xff]
  %v169 = vld [vmem:[%s1 + $0x300] sm:$0xff]
  %v170 = vld [vmem:[%s1 + $0x308] sm:$0xff]
  %vm171 = vcmask 130048
  %v173 = vsel %vm171, %v23, 0
  %v176 = vsel %vm171, %v30, 0
  %v179 = vsel %vm171, %v37, 0
  %v182 = vsel %vm171, %v44, 0
  %v185 = vsel %vm171, %v51, 0
  %v188 = vsel %vm171, %v58, 0
  %v191 = vsel %vm171, %v65, 0
  %v194 = vsel %vm171, %v72, 0
  %196 = vmatprep.subr.mxu0 0.0
  %197 = vmatpush1.msra.mxu0 %v73
  %198 = vmatprep.subr.mxu0 0.0
  %199 = vmatpush1.msra.mxu0 %v74
  %200 = vmatprep.subr.mxu0 0.0
  %201 = vmatpush1.msra.mxu0 %v75
  %202 = vmatprep.subr.mxu0 0.0
  %203 = vmatpush1.msra.mxu0 %v76
  %204 = vmatprep.subr.mxu0 0.0
  %205 = vmatpush1.msra.mxu0 %v77
  %206 = vmatprep.subr.mxu0 0.0
  %207 = vmatpush1.msra.mxu0 %v78
  %208 = vmatprep.subr.mxu0 0.0
  %209 = vmatpush1.msra.mxu0 %v79
  %210 = vmatprep.subr.mxu0 0.0
  %211 = vmatpush1.msra.mxu0 %v80
  %212 = vmatprep.subr.mxu0 0.0
  %213 = vmatpush1.msra.mxu0 %v81
  %214 = vmatprep.subr.mxu0 0.0
  %215 = vmatpush1.msra.mxu0 %v82
  %216 = vmatprep.subr.mxu0 0.0
  %217 = vmatpush1.msra.mxu0 %v83
  %218 = vmatprep.subr.mxu0 0.0
  %219 = vmatpush1.msra.mxu0 %v84
  %220 = vmatprep.subr.mxu0 0.0
  %221 = vmatpush1.msra.mxu0 %v85
  %222 = vmatprep.subr.mxu0 0.0
  %223 = vmatpush1.msra.mxu0 %v86
  %224 = vmatprep.subr.mxu0 0.0
  %225 = vmatpush1.msra.mxu0 %v87
  %226 = vmatprep.subr.mxu0 0.0
  %227 = vmatpush1.msra.mxu0 %v88
  %228 = vmatprep.subr.mxu0 0.0
  %229 = vmatpush1.msra.mxu0 %v89
  %230 = vmatprep.subr.mxu0 0.0
  %231 = vmatpush1.msra.mxu0 %v90
  %232 = vmatprep.subr.mxu0 0.0
  %233 = vmatpush1.msra.mxu0 %v91
  %234 = vmatprep.subr.mxu0 0.0
  %235 = vmatpush1.msra.mxu0 %v92
  %236 = vmatprep.subr.mxu0 0.0
  %237 = vmatpush1.msra.mxu0 %v93
  %238 = vmatprep.subr.mxu0 0.0
  %239 = vmatpush1.msra.mxu0 %v94
  %240 = vmatprep.subr.mxu0 0.0
  %241 = vmatpush1.msra.mxu0 %v95
  %242 = vmatprep.subr.mxu0 0.0
  %243 = vmatpush1.msra.mxu0 %v96
  %244 = vmatprep.subr.mxu0 0.0
  %245 = vmatpush1.msra.mxu0 %v97
  %246 = vmatprep.subr.mxu0 0.0
  %247 = vmatpush1.msra.mxu0 %v98
  %248 = vmatprep.subr.mxu0 0.0
  %249 = vmatpush1.msra.mxu0 %v99
  %250 = vmatprep.subr.mxu0 0.0
  %251 = vmatpush1.msra.mxu0 %v100
  %252 = vmatprep.subr.mxu0 0.0
  %253 = vmatpush1.msra.mxu0 %v101
  %254 = vmatprep.subr.mxu0 0.0
  %255 = vmatpush1.msra.mxu0 %v102
  %256 = vmatprep.subr.mxu0 0.0
  %257 = vmatpush1.msra.mxu0 %v103
  %258 = vmatprep.subr.mxu0 0.0
  %259 = vmatpush1.msra.mxu0 %v104
  %260 = vmatprep.mubr.f32.mxu0 %v18
  %261 = vmatmul.mubr.f32.gmra.mrb[0].mxu0 %v17
  %v262 = vpop.f32.mrb[0].mxu0
  %v263 = vadd.f32 0.0, %v262
  %v264 = vpop.f32.mrb[0].mxu0
  %265 = vmatprep.mubr.f32.mxu0 %v25
  %266 = vmatmul.mubr.f32.gmra.mrb[0].mxu0 %v24
  %v267 = vpop.f32.mrb[0].mxu0
  %v268 = vadd.f32 0.0, %v267
  %v269 = vpop.f32.mrb[0].mxu0
  %270 = vmatprep.mubr.f32.mxu0 %v32
  %271 = vmatmul.mubr.f32.gmra.mrb[0].mxu0 %v31
  %v272 = vpop.f32.mrb[0].mxu0
  %v273 = vadd.f32 0.0, %v272
  %v274 = vpop.f32.mrb[0].mxu0
  %275 = vmatprep.mubr.f32.mxu0 %v39
  %276 = vmatmul.mubr.f32.gmra.mrb[0].mxu0 %v38
  %v277 = vpop.f32.mrb[0].mxu0
  %v278 = vadd.f32 0.0, %v277
  %v279 = vpop.f32.mrb[0].mxu0
  %280 = vmatprep.mubr.f32.mxu0 %v46
  %281 = vmatmul.mubr.f32.gmra.mrb[0].mxu0 %v45
  %v282 = vpop.f32.mrb[0].mxu0
  %v283 = vadd.f32 0.0, %v282
  %v284 = vpop.f32.mrb[0].mxu0
  %285 = vmatprep.mubr.f32.mxu0 %v53
  %286 = vmatmul.mubr.f32.gmra.mrb[0].mxu0 %v52
  %v287 = vpop.f32.mrb[0].mxu0
  %v288 = vadd.f32 0.0, %v287
  %v289 = vpop.f32.mrb[0].mxu0
  %290 = vmatprep.mubr.f32.mxu0 %v60
  %291 = vmatmul.mubr.f32.gmra.mrb[0].mxu0 %v59
  %v292 = vpop.f32.mrb[0].mxu0
  %v293 = vadd.f32 0.0, %v292
  %v294 = vpop.f32.mrb[0].mxu0
  %295 = vmatprep.mubr.f32.mxu0 %v67
  %296 = vmatmul.mubr.f32.gmra.mrb[0].mxu0 %v66
  %v297 = vpop.f32.mrb[0].mxu0
  %v298 = vadd.f32 0.0, %v297
  %v299 = vpop.f32.mrb[0].mxu0
  %300 = vdwg.mxu0
  %301 = vmatprep.subr.mxu0 0.0
  %302 = vmatpush1.msra.mxu0 %v105
  %303 = vmatprep.subr.mxu0 0.0
  %304 = vmatpush1.msra.mxu0 %v106
  %305 = vmatprep.subr.mxu0 0.0
  %306 = vmatpush1.msra.mxu0 %v107
  %307 = vmatprep.subr.mxu0 0.0
  %308 = vmatpush1.msra.mxu0 %v108
  %309 = vmatprep.subr.mxu0 0.0
  %310 = vmatpush1.msra.mxu0 %v109
  %311 = vmatprep.subr.mxu0 0.0
  %312 = vmatpush1.msra.mxu0 %v110
  %313 = vmatprep.subr.mxu0 0.0
  %314 = vmatpush1.msra.mxu0 %v111
  %315 = vmatprep.subr.mxu0 0.0
  %316 = vmatpush1.msra.mxu0 %v112
  %317 = vmatprep.subr.mxu0 0.0
  %318 = vmatpush1.msra.mxu0 %v113
  %319 = vmatprep.subr.mxu0 0.0
  %320 = vmatpush1.msra.mxu0 %v114
  %321 = vmatprep.subr.mxu0 0.0
  %322 = vmatpush1.msra.mxu0 %v115
  %323 = vmatprep.subr.mxu0 0.0
  %324 = vmatpush1.msra.mxu0 %v116
  %325 = vmatprep.subr.mxu0 0.0
  %326 = vmatpush1.msra.mxu0 %v117
  %327 = vmatprep.subr.mxu0 0.0
  %328 = vmatpush1.msra.mxu0 %v118
  %329 = vmatprep.subr.mxu0 0.0
  %330 = vmatpush1.msra.mxu0 %v119
  %331 = vmatprep.subr.mxu0 0.0
  %332 = vmatpush1.msra.mxu0 %v120
  %333 = vmatprep.subr.mxu0 0.0
  %334 = vmatpush1.msra.mxu0 %v121
  %335 = vmatprep.subr.mxu0 0.0
  %336 = vmatpush1.msra.mxu0 %v122
  %337 = vmatprep.subr.mxu0 0.0
  %338 = vmatpush1.msra.mxu0 %v123
  %339 = vmatprep.subr.mxu0 0.0
  %340 = vmatpush1.msra.mxu0 %v124
  %341 = vmatprep.subr.mxu0 0.0
  %342 = vmatpush1.msra.mxu0 %v125
  %343 = vmatprep.subr.mxu0 0.0
  %344 = vmatpush1.msra.mxu0 %v126
  %345 = vmatprep.subr.mxu0 0.0
  %346 = vmatpush1.msra.mxu0 %v127
  %347 = vmatprep.subr.mxu0 0.0
  %348 = vmatpush1.msra.mxu0 %v128
  %349 = vmatprep.subr.mxu0 0.0
  %350 = vmatpush1.msra.mxu0 %v129
  %351 = vmatprep.subr.mxu0 0.0
  %352 = vmatpush1.msra.mxu0 %v130
  %353 = vmatprep.subr.mxu0 0.0
  %354 = vmatpush1.msra.mxu0 %v131
  %355 = vmatprep.subr.mxu0 0.0
  %356 = vmatpush1.msra.mxu0 %v132
  %357 = vmatprep.subr.mxu0 0.0
  %358 = vmatpush1.msra.mxu0 %v133
  %359 = vmatprep.subr.mxu0 0.0
  %360 = vmatpush1.msra.mxu0 %v134
  %361 = vmatprep.subr.mxu0 0.0
  %362 = vmatpush1.msra.mxu0 %v135
  %363 = vmatprep.subr.mxu0 0.0
  %364 = vmatpush1.msra.mxu0 %v136
  %365 = vmatprep.mubr.f32.mxu0 %v20
  %366 = vmatmul.mubr.f32.gmra.mrb[0].mxu0 %v19
  %v367 = vpop.f32.mrb[0].mxu0
  %v368 = vadd.f32 %v263, %v367
  %v369 = vpop.f32.mrb[0].mxu0
  %370 = vmatprep.mubr.f32.mxu0 %v27
  %371 = vmatmul.mubr.f32.gmra.mrb[0].mxu0 %v26
  %v372 = vpop.f32.mrb[0].mxu0
  %v373 = vadd.f32 %v268, %v372
  %v374 = vpop.f32.mrb[0].mxu0
  %375 = vmatprep.mubr.f32.mxu0 %v34
  %376 = vmatmul.mubr.f32.gmra.mrb[0].mxu0 %v33
  %v377 = vpop.f32.mrb[0].mxu0
  %v378 = vadd.f32 %v273, %v377
  %v379 = vpop.f32.mrb[0].mxu0
  %380 = vmatprep.mubr.f32.mxu0 %v41
  %381 = vmatmul.mubr.f32.gmra.mrb[0].mxu0 %v40
  %v382 = vpop.f32.mrb[0].mxu0
  %v383 = vadd.f32 %v278, %v382
  %v384 = vpop.f32.mrb[0].mxu0
  %385 = vmatprep.mubr.f32.mxu0 %v48
  %386 = vmatmul.mubr.f32.gmra.mrb[0].mxu0 %v47
  %v387 = vpop.f32.mrb[0].mxu0
  %v388 = vadd.f32 %v283, %v387
  %v389 = vpop.f32.mrb[0].mxu0
  %390 = vmatprep.mubr.f32.mxu0 %v55
  %391 = vmatmul.mubr.f32.gmra.mrb[0].mxu0 %v54
  %v392 = vpop.f32.mrb[0].mxu0
  %v393 = vadd.f32 %v288, %v392
  %v394 = vpop.f32.mrb[0].mxu0
  %395 = vmatprep.mubr.f32.mxu0 %v62
  %396 = vmatmul.mubr.f32.gmra.mrb[0].mxu0 %v61
  %v397 = vpop.f32.mrb[0].mxu0
  %v398 = vadd.f32 %v293, %v397
  %v399 = vpop.f32.mrb[0].mxu0
  %400 = vmatprep.mubr.f32.mxu0 %v69
  %401 = vmatmul.mubr.f32.gmra.mrb[0].mxu0 %v68
  %v402 = vpop.f32.mrb[0].mxu0
  %v403 = vadd.f32 %v298, %v402
  %v404 = vpop.f32.mrb[0].mxu0
  %405 = vdwg.mxu0
  %406 = vmatprep.subr.mxu0 0.0
  %407 = vmatpush1.msra.mxu0 %v137
  %408 = vmatprep.subr.mxu0 0.0
  %409 = vmatpush1.msra.mxu0 %v138
  %410 = vmatprep.subr.mxu0 0.0
  %411 = vmatpush1.msra.mxu0 %v139
  %412 = vmatprep.subr.mxu0 0.0
  %413 = vmatpush1.msra.mxu0 %v140
  %414 = vmatprep.subr.mxu0 0.0
  %415 = vmatpush1.msra.mxu0 %v141
  %416 = vmatprep.subr.mxu0 0.0
  %417 = vmatpush1.msra.mxu0 %v142
  %418 = vmatprep.subr.mxu0 0.0
  %419 = vmatpush1.msra.mxu0 %v143
  %420 = vmatprep.subr.mxu0 0.0
  %421 = vmatpush1.msra.mxu0 %v144
  %422 = vmatprep.subr.mxu0 0.0
  %423 = vmatpush1.msra.mxu0 %v145
  %424 = vmatprep.subr.mxu0 0.0
  %425 = vmatpush1.msra.mxu0 %v146
  %426 = vmatprep.subr.mxu0 0.0
  %427 = vmatpush1.msra.mxu0 %v147
  %428 = vmatprep.subr.mxu0 0.0
  %429 = vmatpush1.msra.mxu0 %v148
  %430 = vmatprep.subr.mxu0 0.0
  %431 = vmatpush1.msra.mxu0 %v149
  %432 = vmatprep.subr.mxu0 0.0
  %433 = vmatpush1.msra.mxu0 %v150
  %434 = vmatprep.subr.mxu0 0.0
  %435 = vmatpush1.msra.mxu0 %v151
  %436 = vmatprep.subr.mxu0 0.0
  %437 = vmatpush1.msra.mxu0 %v152
  %438 = vmatprep.subr.mxu0 0.0
  %439 = vmatpush1.msra.mxu0 %v153
  %440 = vmatprep.subr.mxu0 0.0
  %441 = vmatpush1.msra.mxu0 %v154
  %442 = vmatprep.subr.mxu0 0.0
  %443 = vmatpush1.msra.mxu0 %v155
  %444 = vmatprep.subr.mxu0 0.0
  %445 = vmatpush1.msra.mxu0 %v156
  %446 = vmatprep.subr.mxu0 0.0
  %447 = vmatpush1.msra.mxu0 %v157
  %448 = vmatprep.subr.mxu0 0.0
  %449 = vmatpush1.msra.mxu0 %v158
  %450 = vmatprep.subr.mxu0 0.0
  %451 = vmatpush1.msra.mxu0 %v159
  %452 = vmatprep.subr.mxu0 0.0
  %453 = vmatpush1.msra.mxu0 %v160
  %454 = vmatprep.subr.mxu0 0.0
  %455 = vmatpush1.msra.mxu0 %v161
  %456 = vmatprep.subr.mxu0 0.0
  %457 = vmatpush1.msra.mxu0 %v162
  %458 = vmatprep.subr.mxu0 0.0
  %459 = vmatpush1.msra.mxu0 %v163
  %460 = vmatprep.subr.mxu0 0.0
  %461 = vmatpush1.msra.mxu0 %v164
  %462 = vmatprep.subr.mxu0 0.0
  %463 = vmatpush1.msra.mxu0 %v165
  %464 = vmatprep.subr.mxu0 0.0
  %465 = vmatpush1.msra.mxu0 %v166
  %466 = vmatprep.subr.mxu0 0.0
  %467 = vmatpush1.msra.mxu0 %v167
  %468 = vmatprep.subr.mxu0 0.0
  %469 = vmatpush1.msra.mxu0 %v168
  %470 = vmatprep.mubr.f32.mxu0 %v22
  %471 = vmatmul.mubr.f32.gmra.mrb[0].mxu0 %v21
  %v472 = vpop.f32.mrb[0].mxu0
  %v473 = vadd.f32 %v368, %v472
  %v474 = vpop.f32.mrb[0].mxu0
  %475 = vmatprep.mubr.f32.mxu0 %v29
  %476 = vmatmul.mubr.f32.gmra.mrb[0].mxu0 %v28
  %v477 = vpop.f32.mrb[0].mxu0
  %v478 = vadd.f32 %v373, %v477
  %v479 = vpop.f32.mrb[0].mxu0
  %480 = vmatprep.mubr.f32.mxu0 %v36
  %481 = vmatmul.mubr.f32.gmra.mrb[0].mxu0 %v35
  %v482 = vpop.f32.mrb[0].mxu0
  %v483 = vadd.f32 %v378, %v482
  %v484 = vpop.f32.mrb[0].mxu0
  %485 = vmatprep.mubr.f32.mxu0 %v43
  %486 = vmatmul.mubr.f32.gmra.mrb[0].mxu0 %v42
  %v487 = vpop.f32.mrb[0].mxu0
  %v488 = vadd.f32 %v383, %v487
  %v489 = vpop.f32.mrb[0].mxu0
  %490 = vmatprep.mubr.f32.mxu0 %v50
  %491 = vmatmul.mubr.f32.gmra.mrb[0].mxu0 %v49
  %v492 = vpop.f32.mrb[0].mxu0
  %v493 = vadd.f32 %v388, %v492
  %v494 = vpop.f32.mrb[0].mxu0
  %495 = vmatprep.mubr.f32.mxu0 %v57
  %496 = vmatmul.mubr.f32.gmra.mrb[0].mxu0 %v56
  %v497 = vpop.f32.mrb[0].mxu0
  %v498 = vadd.f32 %v393, %v497
  %v499 = vpop.f32.mrb[0].mxu0
  %500 = vmatprep.mubr.f32.mxu0 %v64
  %501 = vmatmul.mubr.f32.gmra.mrb[0].mxu0 %v63
  %v502 = vpop.f32.mrb[0].mxu0
  %v503 = vadd.f32 %v398, %v502
  %v504 = vpop.f32.mrb[0].mxu0
  %505 = vmatprep.mubr.f32.mxu0 %v71
  %506 = vmatmul.mubr.f32.gmra.mrb[0].mxu0 %v70
  %v507 = vpop.f32.mrb[0].mxu0
  %v508 = vadd.f32 %v403, %v507
  %v509 = vpop.f32.mrb[0].mxu0
  %510 = vdwg.mxu0
  %511 = vmatprep.subr.mxu0 0.0
  %512 = vmatpush1.msra.mxu0 %v169
  %513 = vmatprep.subr.mxu0 0.0
  %514 = vmatpush1.msra.mxu0 %v170
  %515 = vmatprep.subr.mxu0 0.0
  %516 = vmatpush1.msra.mxu0 0.0
  %517 = vmatprep.subr.mxu0 0.0
  %518 = vmatpush1.msra.mxu0 0.0
  %519 = vmatprep.subr.mxu0 0.0
  %520 = vmatpush1.msra.mxu0 0.0
  %521 = vmatprep.subr.mxu0 0.0
  %522 = vmatpush1.msra.mxu0 0.0
  %523 = vmatprep.subr.mxu0 0.0
  %524 = vmatpush1.msra.mxu0 0.0
  %525 = vmatprep.subr.mxu0 0.0
  %526 = vmatpush1.msra.mxu0 0.0
  %527 = vmatprep.subr.mxu0 0.0
  %528 = vmatpush1.msra.mxu0 0.0
  %529 = vmatprep.subr.mxu0 0.0
  %530 = vmatpush1.msra.mxu0 0.0
  %531 = vmatprep.subr.mxu0 0.0
  %532 = vmatpush1.msra.mxu0 0.0
  %533 = vmatprep.subr.mxu0 0.0
  %534 = vmatpush1.msra.mxu0 0.0
  %535 = vmatprep.subr.mxu0 0.0
  %536 = vmatpush1.msra.mxu0 0.0
  %537 = vmatprep.subr.mxu0 0.0
  %538 = vmatpush1.msra.mxu0 0.0
  %539 = vmatprep.subr.mxu0 0.0
  %540 = vmatpush1.msra.mxu0 0.0
  %541 = vmatprep.subr.mxu0 0.0
  %542 = vmatpush1.msra.mxu0 0.0
  %543 = vmatprep.subr.mxu0 0.0
  %544 = vmatpush1.msra.mxu0 0.0
  %545 = vmatprep.subr.mxu0 0.0
  %546 = vmatpush1.msra.mxu0 0.0
  %547 = vmatprep.subr.mxu0 0.0
  %548 = vmatpush1.msra.mxu0 0.0
  %549 = vmatprep.subr.mxu0 0.0
  %550 = vmatpush1.msra.mxu0 0.0
  %551 = vmatprep.subr.mxu0 0.0
  %552 = vmatpush1.msra.mxu0 0.0
  %553 = vmatprep.subr.mxu0 0.0
  %554 = vmatpush1.msra.mxu0 0.0
  %555 = vmatprep.subr.mxu0 0.0
  %556 = vmatpush1.msra.mxu0 0.0
  %557 = vmatprep.subr.mxu0 0.0
  %558 = vmatpush1.msra.mxu0 0.0
  %559 = vmatprep.subr.mxu0 0.0
  %560 = vmatpush1.msra.mxu0 0.0
  %561 = vmatprep.subr.mxu0 0.0
  %562 = vmatpush1.msra.mxu0 0.0
  %563 = vmatprep.subr.mxu0 0.0
  %564 = vmatpush1.msra.mxu0 0.0
  %565 = vmatprep.subr.mxu0 0.0
  %566 = vmatpush1.msra.mxu0 0.0
  %567 = vmatprep.subr.mxu0 0.0
  %568 = vmatpush1.msra.mxu0 0.0
  %569 = vmatprep.subr.mxu0 0.0
  %570 = vmatpush1.msra.mxu0 0.0
  %571 = vmatprep.subr.mxu0 0.0
  %572 = vmatpush1.msra.mxu0 0.0
  %573 = vmatprep.subr.mxu0 0.0
  %574 = vmatpush1.msra.mxu0 0.0
  %575 = vmatprep.mubr.f32.mxu0 0.0
  %576 = vmatmul.mubr.f32.gmra.mrb[0].mxu0 %v173
  %v577 = vpop.f32.mrb[0].mxu0
  %v578 = vadd.f32 %v473, %v577
  %v579 = vpop.f32.mrb[0].mxu0
  %580 = vmatprep.mubr.f32.mxu0 0.0
  %581 = vmatmul.mubr.f32.gmra.mrb[0].mxu0 %v176
  %v582 = vpop.f32.mrb[0].mxu0
  %v583 = vadd.f32 %v478, %v582
  %v584 = vpop.f32.mrb[0].mxu0
  %585 = vmatprep.mubr.f32.mxu0 0.0
  %586 = vmatmul.mubr.f32.gmra.mrb[0].mxu0 %v179
  %v587 = vpop.f32.mrb[0].mxu0
  %v588 = vadd.f32 %v483, %v587
  %v589 = vpop.f32.mrb[0].mxu0
  %590 = vmatprep.mubr.f32.mxu0 0.0
  %591 = vmatmul.mubr.f32.gmra.mrb[0].mxu0 %v182
  %v592 = vpop.f32.mrb[0].mxu0
  %v593 = vadd.f32 %v488, %v592
  %v594 = vpop.f32.mrb[0].mxu0
  %595 = vmatprep.mubr.f32.mxu0 0.0
  %596 = vmatmul.mubr.f32.gmra.mrb[0].mxu0 %v185
  %v597 = vpop.f32.mrb[0].mxu0
  %v598 = vadd.f32 %v493, %v597
  %v599 = vpop.f32.mrb[0].mxu0
  %600 = vmatprep.mubr.f32.mxu0 0.0
  %601 = vmatmul.mubr.f32.gmra.mrb[0].mxu0 %v188
  %v602 = vpop.f32.mrb[0].mxu0
  %v603 = vadd.f32 %v498, %v602
  %v604 = vpop.f32.mrb[0].mxu0
  %605 = vmatprep.mubr.f32.mxu0 0.0
  %606 = vmatmul.mubr.f32.gmra.mrb[0].mxu0 %v191
  %v607 = vpop.f32.mrb[0].mxu0
  %v608 = vadd.f32 %v503, %v607
  %v609 = vpop.f32.mrb[0].mxu0
  %610 = vmatprep.mubr.f32.mxu0 0.0
  %611 = vmatmul.mubr.f32.gmra.mrb[0].mxu0 %v194
  %v612 = vpop.f32.mrb[0].mxu0
  %v613 = vadd.f32 %v508, %v612
  %v614 = vpop.f32.mrb[0].mxu0
  %615 = vdwg.mxu0
  %v616 = vld [vmem:[%s2] sm:$0xff]
  %v617 = vld [vmem:[%s2 + $0x8] sm:$0xff]
  %v618 = vld [vmem:[%s2 + $0x10] sm:$0xff]
  %v619 = vld [vmem:[%s2 + $0x18] sm:$0xff]
  %vm620 = vcmask 261120
  %v622 = vsel %vm620, 0.0, 0
  %624 = vmatprep.subr.mxu0 0.0
  %625 = vmatpush1.msra.mxu0 %v616
  %626 = vmatprep.subr.mxu0 0.0
  %627 = vmatpush1.msra.mxu0 %v617
  %628 = vmatprep.subr.mxu0 0.0
  %629 = vmatpush1.msra.mxu0 %v618
  %630 = vmatprep.subr.mxu0 0.0
  %631 = vmatpush1.msra.mxu0 %v619
  %632 = vmatprep.subr.mxu0 0.0
  %633 = vmatpush1.msra.mxu0 0.0
  %634 = vmatprep.subr.mxu0 0.0
  %635 = vmatpush1.msra.mxu0 0.0
  %636 = vmatprep.subr.mxu0 0.0
  %637 = vmatpush1.msra.mxu0 0.0
  %638 = vmatprep.subr.mxu0 0.0
  %639 = vmatpush1.msra.mxu0 0.0
  %640 = vmatprep.subr.mxu0 0.0
  %641 = vmatpush1.msra.mxu0 0.0
  %642 = vmatprep.subr.mxu0 0.0
  %643 = vmatpush1.msra.mxu0 0.0
  %644 = vmatprep.subr.mxu0 0.0
  %645 = vmatpush1.msra.mxu0 0.0
  %646 = vmatprep.subr.mxu0 0.0
  %647 = vmatpush1.msra.mxu0 0.0
  %648 = vmatprep.subr.mxu0 0.0
  %649 = vmatpush1.msra.mxu0 0.0
  %650 = vmatprep.subr.mxu0 0.0
  %651 = vmatpush1.msra.mxu0 0.0
  %652 = vmatprep.subr.mxu0 0.0
  %653 = vmatpush1.msra.mxu0 0.0
  %654 = vmatprep.subr.mxu0 0.0
  %655 = vmatpush1.msra.mxu0 0.0
  %656 = vmatprep.subr.mxu0 0.0
  %657 = vmatpush1.msra.mxu0 0.0
  %658 = vmatprep.subr.mxu0 0.0
  %659 = vmatpush1.msra.mxu0 0.0
  %660 = vmatprep.subr.mxu0 0.0
  %661 = vmatpush1.msra.mxu0 0.0
  %662 = vmatprep.subr.mxu0 0.0
  %663 = vmatpush1.msra.mxu0 0.0
  %664 = vmatprep.subr.mxu0 0.0
  %665 = vmatpush1.msra.mxu0 0.0
  %666 = vmatprep.subr.mxu0 0.0
  %667 = vmatpush1.msra.mxu0 0.0
  %668 = vmatprep.subr.mxu0 0.0
  %669 = vmatpush1.msra.mxu0 0.0
  %670 = vmatprep.subr.mxu0 0.0
  %671 = vmatpush1.msra.mxu0 0.0
  %672 = vmatprep.subr.mxu0 0.0
  %673 = vmatpush1.msra.mxu0 0.0
  %674 = vmatprep.subr.mxu0 0.0
  %675 = vmatpush1.msra.mxu0 0.0
  %676 = vmatprep.subr.mxu0 0.0
  %677 = vmatpush1.msra.mxu0 0.0
  %678 = vmatprep.subr.mxu0 0.0
  %679 = vmatpush1.msra.mxu0 0.0
  %680 = vmatprep.subr.mxu0 0.0
  %681 = vmatpush1.msra.mxu0 0.0
  %682 = vmatprep.subr.mxu0 0.0
  %683 = vmatpush1.msra.mxu0 0.0
  %684 = vmatprep.subr.mxu0 0.0
  %685 = vmatpush1.msra.mxu0 0.0
  %686 = vmatprep.subr.mxu0 0.0
  %687 = vmatpush1.msra.mxu0 0.0
  %688 = vmatprep.mubr.f32.mxu0 0.0
  %689 = vmatmul.mubr.f32.gmra.mrb[0].mxu0 %v622
  %v690 = vpop.f32.mrb[0].mxu0
  %v691 = vadd.f32 0.0, %v690
  %v692 = vpop.f32.mrb[0].mxu0
  %693 = vdwg.mxu0
  %v694 = vadd.f32 %v578, %v691
  %v695 = vmul.f32 %v694, 0.095162585
  %v696 = vadd.f32 %v695, 0.0
  %v697 = vtanh.pop %v696
  %v699 = vsel %vm620, %v697, 0
  %701 = vmatprep.subr.mxu0 0.0
  %702 = vmatpush1.msra.mxu0 %v616
  %703 = vmatprep.subr.mxu0 0.0
  %704 = vmatpush1.msra.mxu0 %v617
  %705 = vmatprep.subr.mxu0 0.0
  %706 = vmatpush1.msra.mxu0 %v618
  %707 = vmatprep.subr.mxu0 0.0
  %708 = vmatpush1.msra.mxu0 %v619
  %709 = vmatprep.subr.mxu0 0.0
  %710 = vmatpush1.msra.mxu0 0.0
  %711 = vmatprep.subr.mxu0 0.0
  %712 = vmatpush1.msra.mxu0 0.0
  %713 = vmatprep.subr.mxu0 0.0
  %714 = vmatpush1.msra.mxu0 0.0
  %715 = vmatprep.subr.mxu0 0.0
  %716 = vmatpush1.msra.mxu0 0.0
  %717 = vmatprep.subr.mxu0 0.0
  %718 = vmatpush1.msra.mxu0 0.0
  %719 = vmatprep.subr.mxu0 0.0
  %720 = vmatpush1.msra.mxu0 0.0
  %721 = vmatprep.subr.mxu0 0.0
  %722 = vmatpush1.msra.mxu0 0.0
  %723 = vmatprep.subr.mxu0 0.0
  %724 = vmatpush1.msra.mxu0 0.0
  %725 = vmatprep.subr.mxu0 0.0
  %726 = vmatpush1.msra.mxu0 0.0
  %727 = vmatprep.subr.mxu0 0.0
  %728 = vmatpush1.msra.mxu0 0.0
  %729 = vmatprep.subr.mxu0 0.0
  %730 = vmatpush1.msra.mxu0 0.0
  %731 = vmatprep.subr.mxu0 0.0
  %732 = vmatpush1.msra.mxu0 0.0
  %733 = vmatprep.subr.mxu0 0.0
  %734 = vmatpush1.msra.mxu0 0.0
  %735 = vmatprep.subr.mxu0 0.0
  %736 = vmatpush1.msra.mxu0 0.0
  %737 = vmatprep.subr.mxu0 0.0
  %738 = vmatpush1.msra.mxu0 0.0
  %739 = vmatprep.subr.mxu0 0.0
  %740 = vmatpush1.msra.mxu0 0.0
  %741 = vmatprep.subr.mxu0 0.0
  %742 = vmatpush1.msra.mxu0 0.0
  %743 = vmatprep.subr.mxu0 0.0
  %744 = vmatpush1.msra.mxu0 0.0
  %745 = vmatprep.subr.mxu0 0.0
  %746 = vmatpush1.msra.mxu0 0.0
  %747 = vmatprep.subr.mxu0 0.0
  %748 = vmatpush1.msra.mxu0 0.0
  %749 = vmatprep.subr.mxu0 0.0
  %750 = vmatpush1.msra.mxu0 0.0
  %751 = vmatprep.subr.mxu0 0.0
  %752 = vmatpush1.msra.mxu0 0.0
  %753 = vmatprep.subr.mxu0 0.0
  %754 = vmatpush1.msra.mxu0 0.0
  %755 = vmatprep.subr.mxu0 0.0
  %756 = vmatpush1.msra.mxu0 0.0
  %757 = vmatprep.subr.mxu0 0.0
  %758 = vmatpush1.msra.mxu0 0.0
  %759 = vmatprep.subr.mxu0 0.0
  %760 = vmatpush1.msra.mxu0 0.0
  %761 = vmatprep.subr.mxu0 0.0
  %762 = vmatpush1.msra.mxu0 0.0
  %763 = vmatprep.subr.mxu0 0.0
  %764 = vmatpush1.msra.mxu0 0.0
  %765 = vmatprep.mubr.f32.mxu0 0.0
  %766 = vmatmul.mubr.f32.gmra.mrb[0].mxu0 %v699
  %v767 = vpop.f32.mrb[0].mxu0
  %v768 = vadd.f32 0.0, %v767
  %v769 = vpop.f32.mrb[0].mxu0
  %770 = vdwg.mxu0
  %v771 = vadd.f32 %v583, %v768
  %v772 = vmul.f32 %v696, 0.9048374
  %v773 = vmul.f32 %v771, 0.095162585
  %v774 = vadd.f32 %v772, %v773
  %v775 = vtanh.pop %v774
  %v776 = vmax.f32 %v697, %v775
  %v778 = vsel %vm620, %v775, 0
  %780 = vmatprep.subr.mxu0 0.0
  %781 = vmatpush1.msra.mxu0 %v616
  %782 = vmatprep.subr.mxu0 0.0
  %783 = vmatpush1.msra.mxu0 %v617
  %784 = vmatprep.subr.mxu0 0.0
  %785 = vmatpush1.msra.mxu0 %v618
  %786 = vmatprep.subr.mxu0 0.0
  %787 = vmatpush1.msra.mxu0 %v619
  %788 = vmatprep.subr.mxu0 0.0
  %789 = vmatpush1.msra.mxu0 0.0
  %790 = vmatprep.subr.mxu0 0.0
  %791 = vmatpush1.msra.mxu0 0.0
  %792 = vmatprep.subr.mxu0 0.0
  %793 = vmatpush1.msra.mxu0 0.0
  %794 = vmatprep.subr.mxu0 0.0
  %795 = vmatpush1.msra.mxu0 0.0
  %796 = vmatprep.subr.mxu0 0.0
  %797 = vmatpush1.msra.mxu0 0.0
  %798 = vmatprep.subr.mxu0 0.0
  %799 = vmatpush1.msra.mxu0 0.0
  %800 = vmatprep.subr.mxu0 0.0
  %801 = vmatpush1.msra.mxu0 0.0
  %802 = vmatprep.subr.mxu0 0.0
  %803 = vmatpush1.msra.mxu0 0.0
  %804 = vmatprep.subr.mxu0 0.0
  %805 = vmatpush1.msra.mxu0 0.0
  %806 = vmatprep.subr.mxu0 0.0
  %807 = vmatpush1.msra.mxu0 0.0
  %808 = vmatprep.subr.mxu0 0.0
  %809 = vmatpush1.msra.mxu0 0.0
  %810 = vmatprep.subr.mxu0 0.0
  %811 = vmatpush1.msra.mxu0 0.0
  %812 = vmatprep.subr.mxu0 0.0
  %813 = vmatpush1.msra.mxu0 0.0
  %814 = vmatprep.subr.mxu0 0.0
  %815 = vmatpush1.msra.mxu0 0.0
  %816 = vmatprep.subr.mxu0 0.0
  %817 = vmatpush1.msra.mxu0 0.0
  %818 = vmatprep.subr.mxu0 0.0
  %819 = vmatpush1.msra.mxu0 0.0
  %820 = vmatprep.subr.mxu0 0.0
  %821 = vmatpush1.msra.mxu0 0.0
  %822 = vmatprep.subr.mxu0 0.0
  %823 = vmatpush1.msra.mxu0 0.0
  %824 = vmatprep.subr.mxu0 0.0
  %825 = vmatpush1.msra.mxu0 0.0
  %826 = vmatprep.subr.mxu0 0.0
  %827 = vmatpush1.msra.mxu0 0.0
  %828 = vmatprep.subr.mxu0 0.0
  %829 = vmatpush1.msra.mxu0 0.0
  %830 = vmatprep.subr.mxu0 0.0
  %831 = vmatpush1.msra.mxu0 0.0
  %832 = vmatprep.subr.mxu0 0.0
  %833 = vmatpush1.msra.mxu0 0.0
  %834 = vmatprep.subr.mxu0 0.0
  %835 = vmatpush1.msra.mxu0 0.0
  %836 = vmatprep.subr.mxu0 0.0
  %837 = vmatpush1.msra.mxu0 0.0
  %838 = vmatprep.subr.mxu0 0.0
  %839 = vmatpush1.msra.mxu0 0.0
  %840 = vmatprep.subr.mxu0 0.0
  %841 = vmatpush1.msra.mxu0 0.0
  %842 = vmatprep.subr.mxu0 0.0
  %843 = vmatpush1.msra.mxu0 0.0
  %844 = vmatprep.mubr.f32.mxu0 0.0
  %845 = vmatmul.mubr.f32.gmra.mrb[0].mxu0 %v778
  %v846 = vpop.f32.mrb[0].mxu0
  %v847 = vadd.f32 0.0, %v846
  %v848 = vpop.f32.mrb[0].mxu0
  %849 = vdwg.mxu0
  %v850 = vadd.f32 %v588, %v847
  %v851 = vmul.f32 %v774, 0.9048374
  %v852 = vmul.f32 %v850, 0.095162585
  %v853 = vadd.f32 %v851, %v852
  %v854 = vtanh.pop %v853
  %v855 = vmax.f32 %v776, %v854
  %v857 = vsel %vm620, %v854, 0
  %859 = vmatprep.subr.mxu0 0.0
  %860 = vmatpush1.msra.mxu0 %v616
  %861 = vmatprep.subr.mxu0 0.0
  %862 = vmatpush1.msra.mxu0 %v617
  %863 = vmatprep.subr.mxu0 0.0
  %864 = vmatpush1.msra.mxu0 %v618
  %865 = vmatprep.subr.mxu0 0.0
  %866 = vmatpush1.msra.mxu0 %v619
  %867 = vmatprep.subr.mxu0 0.0
  %868 = vmatpush1.msra.mxu0 0.0
  %869 = vmatprep.subr.mxu0 0.0
  %870 = vmatpush1.msra.mxu0 0.0
  %871 = vmatprep.subr.mxu0 0.0
  %872 = vmatpush1.msra.mxu0 0.0
  %873 = vmatprep.subr.mxu0 0.0
  %874 = vmatpush1.msra.mxu0 0.0
  %875 = vmatprep.subr.mxu0 0.0
  %876 = vmatpush1.msra.mxu0 0.0
  %877 = vmatprep.subr.mxu0 0.0
  %878 = vmatpush1.msra.mxu0 0.0
  %879 = vmatprep.subr.mxu0 0.0
  %880 = vmatpush1.msra.mxu0 0.0
  %881 = vmatprep.subr.mxu0 0.0
  %882 = vmatpush1.msra.mxu0 0.0
  %883 = vmatprep.subr.mxu0 0.0
  %884 = vmatpush1.msra.mxu0 0.0
  %885 = vmatprep.subr.mxu0 0.0
  %886 = vmatpush1.msra.mxu0 0.0
  %887 = vmatprep.subr.mxu0 0.0
  %888 = vmatpush1.msra.mxu0 0.0
  %889 = vmatprep.subr.mxu0 0.0
  %890 = vmatpush1.msra.mxu0 0.0
  %891 = vmatprep.subr.mxu0 0.0
  %892 = vmatpush1.msra.mxu0 0.0
  %893 = vmatprep.subr.mxu0 0.0
  %894 = vmatpush1.msra.mxu0 0.0
  %895 = vmatprep.subr.mxu0 0.0
  %896 = vmatpush1.msra.mxu0 0.0
  %897 = vmatprep.subr.mxu0 0.0
  %898 = vmatpush1.msra.mxu0 0.0
  %899 = vmatprep.subr.mxu0 0.0
  %900 = vmatpush1.msra.mxu0 0.0
  %901 = vmatprep.subr.mxu0 0.0
  %902 = vmatpush1.msra.mxu0 0.0
  %903 = vmatprep.subr.mxu0 0.0
  %904 = vmatpush1.msra.mxu0 0.0
  %905 = vmatprep.subr.mxu0 0.0
  %906 = vmatpush1.msra.mxu0 0.0
  %907 = vmatprep.subr.mxu0 0.0
  %908 = vmatpush1.msra.mxu0 0.0
  %909 = vmatprep.subr.mxu0 0.0
  %910 = vmatpush1.msra.mxu0 0.0
  %911 = vmatprep.subr.mxu0 0.0
  %912 = vmatpush1.msra.mxu0 0.0
  %913 = vmatprep.subr.mxu0 0.0
  %914 = vmatpush1.msra.mxu0 0.0
  %915 = vmatprep.subr.mxu0 0.0
  %916 = vmatpush1.msra.mxu0 0.0
  %917 = vmatprep.subr.mxu0 0.0
  %918 = vmatpush1.msra.mxu0 0.0
  %919 = vmatprep.subr.mxu0 0.0
  %920 = vmatpush1.msra.mxu0 0.0
  %921 = vmatprep.subr.mxu0 0.0
  %922 = vmatpush1.msra.mxu0 0.0
  %923 = vmatprep.mubr.f32.mxu0 0.0
  %924 = vmatmul.mubr.f32.gmra.mrb[0].mxu0 %v857
  %v925 = vpop.f32.mrb[0].mxu0
  %v926 = vadd.f32 0.0, %v925
  %v927 = vpop.f32.mrb[0].mxu0
  %928 = vdwg.mxu0
  %v929 = vadd.f32 %v593, %v926
  %v930 = vmul.f32 %v853, 0.9048374
  %v931 = vmul.f32 %v929, 0.095162585
  %v932 = vadd.f32 %v930, %v931
  %v933 = vtanh.pop %v932
  %v934 = vmax.f32 %v855, %v933
  %v936 = vsel %vm620, %v933, 0
  %938 = vmatprep.subr.mxu0 0.0
  %939 = vmatpush1.msra.mxu0 %v616
  %940 = vmatprep.subr.mxu0 0.0
  %941 = vmatpush1.msra.mxu0 %v617
  %942 = vmatprep.subr.mxu0 0.0
  %943 = vmatpush1.msra.mxu0 %v618
  %944 = vmatprep.subr.mxu0 0.0
  %945 = vmatpush1.msra.mxu0 %v619
  %946 = vmatprep.subr.mxu0 0.0
  %947 = vmatpush1.msra.mxu0 0.0
  %948 = vmatprep.subr.mxu0 0.0
  %949 = vmatpush1.msra.mxu0 0.0
  %950 = vmatprep.subr.mxu0 0.0
  %951 = vmatpush1.msra.mxu0 0.0
  %952 = vmatprep.subr.mxu0 0.0
  %953 = vmatpush1.msra.mxu0 0.0
  %954 = vmatprep.subr.mxu0 0.0
  %955 = vmatpush1.msra.mxu0 0.0
  %956 = vmatprep.subr.mxu0 0.0
  %957 = vmatpush1.msra.mxu0 0.0
  %958 = vmatprep.subr.mxu0 0.0
  %959 = vmatpush1.msra.mxu0 0.0
  %960 = vmatprep.subr.mxu0 0.0
  %961 = vmatpush1.msra.mxu0 0.0
  %962 = vmatprep.subr.mxu0 0.0
  %963 = vmatpush1.msra.mxu0 0.0
  %964 = vmatprep.subr.mxu0 0.0
  %965 = vmatpush1.msra.mxu0 0.0
  %966 = vmatprep.subr.mxu0 0.0
  %967 = vmatpush1.msra.mxu0 0.0
  %968 = vmatprep.subr.mxu0 0.0
  %969 = vmatpush1.msra.mxu0 0.0
  %970 = vmatprep.subr.mxu0 0.0
  %971 = vmatpush1.msra.mxu0 0.0
  %972 = vmatprep.subr.mxu0 0.0
  %973 = vmatpush1.msra.mxu0 0.0
  %974 = vmatprep.subr.mxu0 0.0
  %975 = vmatpush1.msra.mxu0 0.0
  %976 = vmatprep.subr.mxu0 0.0
  %977 = vmatpush1.msra.mxu0 0.0
  %978 = vmatprep.subr.mxu0 0.0
  %979 = vmatpush1.msra.mxu0 0.0
  %980 = vmatprep.subr.mxu0 0.0
  %981 = vmatpush1.msra.mxu0 0.0
  %982 = vmatprep.subr.mxu0 0.0
  %983 = vmatpush1.msra.mxu0 0.0
  %984 = vmatprep.subr.mxu0 0.0
  %985 = vmatpush1.msra.mxu0 0.0
  %986 = vmatprep.subr.mxu0 0.0
  %987 = vmatpush1.msra.mxu0 0.0
  %988 = vmatprep.subr.mxu0 0.0
  %989 = vmatpush1.msra.mxu0 0.0
  %990 = vmatprep.subr.mxu0 0.0
  %991 = vmatpush1.msra.mxu0 0.0
  %992 = vmatprep.subr.mxu0 0.0
  %993 = vmatpush1.msra.mxu0 0.0
  %994 = vmatprep.subr.mxu0 0.0
  %995 = vmatpush1.msra.mxu0 0.0
  %996 = vmatprep.subr.mxu0 0.0
  %997 = vmatpush1.msra.mxu0 0.0
  %998 = vmatprep.subr.mxu0 0.0
  %999 = vmatpush1.msra.mxu0 0.0
  %1000 = vmatprep.subr.mxu0 0.0
  %1001 = vmatpush1.msra.mxu0 0.0
  %1002 = vmatprep.mubr.f32.mxu0 0.0
  %1003 = vmatmul.mubr.f32.gmra.mrb[0].mxu0 %v936
  %v1004 = vpop.f32.mrb[0].mxu0
  %v1005 = vadd.f32 0.0, %v1004
  %v1006 = vpop.f32.mrb[0].mxu0
  %1007 = vdwg.mxu0
  %v1008 = vadd.f32 %v598, %v1005
  %v1009 = vmul.f32 %v932, 0.9048374
  %v1010 = vmul.f32 %v1008, 0.095162585
  %v1011 = vadd.f32 %v1009, %v1010
  %v1012 = vtanh.pop %v1011
  %v1013 = vmax.f32 %v934, %v1012
  %v1015 = vsel %vm620, %v1012, 0
  %1017 = vmatprep.subr.mxu0 0.0
  %1018 = vmatpush1.msra.mxu0 %v616
  %1019 = vmatprep.subr.mxu0 0.0
  %1020 = vmatpush1.msra.mxu0 %v617
  %1021 = vmatprep.subr.mxu0 0.0
  %1022 = vmatpush1.msra.mxu0 %v618
  %1023 = vmatprep.subr.mxu0 0.0
  %1024 = vmatpush1.msra.mxu0 %v619
  %1025 = vmatprep.subr.mxu0 0.0
  %1026 = vmatpush1.msra.mxu0 0.0
  %1027 = vmatprep.subr.mxu0 0.0
  %1028 = vmatpush1.msra.mxu0 0.0
  %1029 = vmatprep.subr.mxu0 0.0
  %1030 = vmatpush1.msra.mxu0 0.0
  %1031 = vmatprep.subr.mxu0 0.0
  %1032 = vmatpush1.msra.mxu0 0.0
  %1033 = vmatprep.subr.mxu0 0.0
  %1034 = vmatpush1.msra.mxu0 0.0
  %1035 = vmatprep.subr.mxu0 0.0
  %1036 = vmatpush1.msra.mxu0 0.0
  %1037 = vmatprep.subr.mxu0 0.0
  %1038 = vmatpush1.msra.mxu0 0.0
  %1039 = vmatprep.subr.mxu0 0.0
  %1040 = vmatpush1.msra.mxu0 0.0
  %1041 = vmatprep.subr.mxu0 0.0
  %1042 = vmatpush1.msra.mxu0 0.0
  %1043 = vmatprep.subr.mxu0 0.0
  %1044 = vmatpush1.msra.mxu0 0.0
  %1045 = vmatprep.subr.mxu0 0.0
  %1046 = vmatpush1.msra.mxu0 0.0
  %1047 = vmatprep.subr.mxu0 0.0
  %1048 = vmatpush1.msra.mxu0 0.0
  %1049 = vmatprep.subr.mxu0 0.0
  %1050 = vmatpush1.msra.mxu0 0.0
  %1051 = vmatprep.subr.mxu0 0.0
  %1052 = vmatpush1.msra.mxu0 0.0
  %1053 = vmatprep.subr.mxu0 0.0
  %1054 = vmatpush1.msra.mxu0 0.0
  %1055 = vmatprep.subr.mxu0 0.0
  %1056 = vmatpush1.msra.mxu0 0.0
  %1057 = vmatprep.subr.mxu0 0.0
  %1058 = vmatpush1.msra.mxu0 0.0
  %1059 = vmatprep.subr.mxu0 0.0
  %1060 = vmatpush1.msra.mxu0 0.0
  %1061 = vmatprep.subr.mxu0 0.0
  %1062 = vmatpush1.msra.mxu0 0.0
  %1063 = vmatprep.subr.mxu0 0.0
  %1064 = vmatpush1.msra.mxu0 0.0
  %1065 = vmatprep.subr.mxu0 0.0
  %1066 = vmatpush1.msra.mxu0 0.0
  %1067 = vmatprep.subr.mxu0 0.0
  %1068 = vmatpush1.msra.mxu0 0.0
  %1069 = vmatprep.subr.mxu0 0.0
  %1070 = vmatpush1.msra.mxu0 0.0
  %1071 = vmatprep.subr.mxu0 0.0
  %1072 = vmatpush1.msra.mxu0 0.0
  %1073 = vmatprep.subr.mxu0 0.0
  %1074 = vmatpush1.msra.mxu0 0.0
  %1075 = vmatprep.subr.mxu0 0.0
  %1076 = vmatpush1.msra.mxu0 0.0
  %1077 = vmatprep.subr.mxu0 0.0
  %1078 = vmatpush1.msra.mxu0 0.0
  %1079 = vmatprep.subr.mxu0 0.0
  %1080 = vmatpush1.msra.mxu0 0.0
  %1081 = vmatprep.mubr.f32.mxu0 0.0
  %1082 = vmatmul.mubr.f32.gmra.mrb[0].mxu0 %v1015
  %v1083 = vpop.f32.mrb[0].mxu0
  %v1084 = vadd.f32 0.0, %v1083
  %v1085 = vpop.f32.mrb[0].mxu0
  %1086 = vdwg.mxu0
  %v1087 = vadd.f32 %v603, %v1084
  %v1088 = vmul.f32 %v1011, 0.9048374
  %v1089 = vmul.f32 %v1087, 0.095162585
  %v1090 = vadd.f32 %v1088, %v1089
  %v1091 = vtanh.pop %v1090
  %v1092 = vmax.f32 %v1013, %v1091
  %v1094 = vsel %vm620, %v1091, 0
  %1096 = vmatprep.subr.mxu0 0.0
  %1097 = vmatpush1.msra.mxu0 %v616
  %1098 = vmatprep.subr.mxu0 0.0
  %1099 = vmatpush1.msra.mxu0 %v617
  %1100 = vmatprep.subr.mxu0 0.0
  %1101 = vmatpush1.msra.mxu0 %v618
  %1102 = vmatprep.subr.mxu0 0.0
  %1103 = vmatpush1.msra.mxu0 %v619
  %1104 = vmatprep.subr.mxu0 0.0
  %1105 = vmatpush1.msra.mxu0 0.0
  %1106 = vmatprep.subr.mxu0 0.0
  %1107 = vmatpush1.msra.mxu0 0.0
  %1108 = vmatprep.subr.mxu0 0.0
  %1109 = vmatpush1.msra.mxu0 0.0
  %1110 = vmatprep.subr.mxu0 0.0
  %1111 = vmatpush1.msra.mxu0 0.0
  %1112 = vmatprep.subr.mxu0 0.0
  %1113 = vmatpush1.msra.mxu0 0.0
  %1114 = vmatprep.subr.mxu0 0.0
  %1115 = vmatpush1.msra.mxu0 0.0
  %1116 = vmatprep.subr.mxu0 0.0
  %1117 = vmatpush1.msra.mxu0 0.0
  %1118 = vmatprep.subr.mxu0 0.0
  %1119 = vmatpush1.msra.mxu0 0.0
  %1120 = vmatprep.subr.mxu0 0.0
  %1121 = vmatpush1.msra.mxu0 0.0
  %1122 = vmatprep.subr.mxu0 0.0
  %1123 = vmatpush1.msra.mxu0 0.0
  %1124 = vmatprep.subr.mxu0 0.0
  %1125 = vmatpush1.msra.mxu0 0.0
  %1126 = vmatprep.subr.mxu0 0.0
  %1127 = vmatpush1.msra.mxu0 0.0
  %1128 = vmatprep.subr.mxu0 0.0
  %1129 = vmatpush1.msra.mxu0 0.0
  %1130 = vmatprep.subr.mxu0 0.0
  %1131 = vmatpush1.msra.mxu0 0.0
  %1132 = vmatprep.subr.mxu0 0.0
  %1133 = vmatpush1.msra.mxu0 0.0
  %1134 = vmatprep.subr.mxu0 0.0
  %1135 = vmatpush1.msra.mxu0 0.0
  %1136 = vmatprep.subr.mxu0 0.0
  %1137 = vmatpush1.msra.mxu0 0.0
  %1138 = vmatprep.subr.mxu0 0.0
  %1139 = vmatpush1.msra.mxu0 0.0
  %1140 = vmatprep.subr.mxu0 0.0
  %1141 = vmatpush1.msra.mxu0 0.0
  %1142 = vmatprep.subr.mxu0 0.0
  %1143 = vmatpush1.msra.mxu0 0.0
  %1144 = vmatprep.subr.mxu0 0.0
  %1145 = vmatpush1.msra.mxu0 0.0
  %1146 = vmatprep.subr.mxu0 0.0
  %1147 = vmatpush1.msra.mxu0 0.0
  %1148 = vmatprep.subr.mxu0 0.0
  %1149 = vmatpush1.msra.mxu0 0.0
  %1150 = vmatprep.subr.mxu0 0.0
  %1151 = vmatpush1.msra.mxu0 0.0
  %1152 = vmatprep.subr.mxu0 0.0
  %1153 = vmatpush1.msra.mxu0 0.0
  %1154 = vmatprep.subr.mxu0 0.0
  %1155 = vmatpush1.msra.mxu0 0.0
  %1156 = vmatprep.subr.mxu0 0.0
  %1157 = vmatpush1.msra.mxu0 0.0
  %1158 = vmatprep.subr.mxu0 0.0
  %1159 = vmatpush1.msra.mxu0 0.0
  %1160 = vmatprep.mubr.f32.mxu0 0.0
  %1161 = vmatmul.mubr.f32.gmra.mrb[0].mxu0 %v1094
  %v1162 = vpop.f32.mrb[0].mxu0
  %v1163 = vadd.f32 0.0, %v1162
  %v1164 = vpop.f32.mrb[0].mxu0
  %1165 = vdwg.mxu0
  %v1166 = vadd.f32 %v608, %v1163
  %v1167 = vmul.f32 %v1090, 0.9048374
  %v1168 = vmul.f32 %v1166, 0.095162585
  %v1169 = vadd.f32 %v1167, %v1168
  %v1170 = vtanh.pop %v1169
  %v1171 = vmax.f32 %v1092, %v1170
  %v1173 = vsel %vm620, %v1170, 0
  %1175 = vmatprep.subr.mxu0 0.0
  %1176 = vmatpush1.msra.mxu0 %v616
  %1177 = vmatprep.subr.mxu0 0.0
  %1178 = vmatpush1.msra.mxu0 %v617
  %1179 = vmatprep.subr.mxu0 0.0
  %1180 = vmatpush1.msra.mxu0 %v618
  %1181 = vmatprep.subr.mxu0 0.0
  %1182 = vmatpush1.msra.mxu0 %v619
  %1183 = vmatprep.subr.mxu0 0.0
  %1184 = vmatpush1.msra.mxu0 0.0
  %1185 = vmatprep.subr.mxu0 0.0
  %1186 = vmatpush1.msra.mxu0 0.0
  %1187 = vmatprep.subr.mxu0 0.0
  %1188 = vmatpush1.msra.mxu0 0.0
  %1189 = vmatprep.subr.mxu0 0.0
  %1190 = vmatpush1.msra.mxu0 0.0
  %1191 = vmatprep.subr.mxu0 0.0
  %1192 = vmatpush1.msra.mxu0 0.0
  %1193 = vmatprep.subr.mxu0 0.0
  %1194 = vmatpush1.msra.mxu0 0.0
  %1195 = vmatprep.subr.mxu0 0.0
  %1196 = vmatpush1.msra.mxu0 0.0
  %1197 = vmatprep.subr.mxu0 0.0
  %1198 = vmatpush1.msra.mxu0 0.0
  %1199 = vmatprep.subr.mxu0 0.0
  %1200 = vmatpush1.msra.mxu0 0.0
  %1201 = vmatprep.subr.mxu0 0.0
  %1202 = vmatpush1.msra.mxu0 0.0
  %1203 = vmatprep.subr.mxu0 0.0
  %1204 = vmatpush1.msra.mxu0 0.0
  %1205 = vmatprep.subr.mxu0 0.0
  %1206 = vmatpush1.msra.mxu0 0.0
  %1207 = vmatprep.subr.mxu0 0.0
  %1208 = vmatpush1.msra.mxu0 0.0
  %1209 = vmatprep.subr.mxu0 0.0
  %1210 = vmatpush1.msra.mxu0 0.0
  %1211 = vmatprep.subr.mxu0 0.0
  %1212 = vmatpush1.msra.mxu0 0.0
  %1213 = vmatprep.subr.mxu0 0.0
  %1214 = vmatpush1.msra.mxu0 0.0
  %1215 = vmatprep.subr.mxu0 0.0
  %1216 = vmatpush1.msra.mxu0 0.0
  %1217 = vmatprep.subr.mxu0 0.0
  %1218 = vmatpush1.msra.mxu0 0.0
  %1219 = vmatprep.subr.mxu0 0.0
  %1220 = vmatpush1.msra.mxu0 0.0
  %1221 = vmatprep.subr.mxu0 0.0
  %1222 = vmatpush1.msra.mxu0 0.0
  %1223 = vmatprep.subr.mxu0 0.0
  %1224 = vmatpush1.msra.mxu0 0.0
  %1225 = vmatprep.subr.mxu0 0.0
  %1226 = vmatpush1.msra.mxu0 0.0
  %1227 = vmatprep.subr.mxu0 0.0
  %1228 = vmatpush1.msra.mxu0 0.0
  %1229 = vmatprep.subr.mxu0 0.0
  %1230 = vmatpush1.msra.mxu0 0.0
  %1231 = vmatprep.subr.mxu0 0.0
  %1232 = vmatpush1.msra.mxu0 0.0
  %1233 = vmatprep.subr.mxu0 0.0
  %1234 = vmatpush1.msra.mxu0 0.0
  %1235 = vmatprep.subr.mxu0 0.0
  %1236 = vmatpush1.msra.mxu0 0.0
  %1237 = vmatprep.subr.mxu0 0.0
  %1238 = vmatpush1.msra.mxu0 0.0
  %1239 = vmatprep.mubr.f32.mxu0 0.0
  %1240 = vmatmul.mubr.f32.gmra.mrb[0].mxu0 %v1173
  %v1241 = vpop.f32.mrb[0].mxu0
  %v1242 = vadd.f32 0.0, %v1241
  %v1243 = vpop.f32.mrb[0].mxu0
  %1244 = vdwg.mxu0
  %v1245 = vadd.f32 %v613, %v1242
  %v1246 = vmul.f32 %v1169, 0.9048374
  %v1247 = vmul.f32 %v1245, 0.095162585
  %v1248 = vadd.f32 %v1246, %v1247
  %v1249 = vtanh.pop %v1248
  %v1250 = vmax.f32 %v1171, %v1249
  %v1251 = vld [vmem:[%s3] sm:$0xff]
  %v1252 = vld [vmem:[%s3 + $0x8] sm:$0xff]
  %v1253 = vld [vmem:[%s3 + $0x10] sm:$0xff]
  %v1254 = vld [vmem:[%s3 + $0x18] sm:$0xff]
  %v1256 = vsel %vm620, %v1250, 0
  %1258 = vmatprep.subr.mxu0 0.0
  %1259 = vmatpush1.msra.mxu0 %v1251
  %1260 = vmatprep.subr.mxu0 0.0
  %1261 = vmatpush1.msra.mxu0 %v1252
  %1262 = vmatprep.subr.mxu0 0.0
  %1263 = vmatpush1.msra.mxu0 %v1253
  %1264 = vmatprep.subr.mxu0 0.0
  %1265 = vmatpush1.msra.mxu0 %v1254
  %1266 = vmatprep.subr.mxu0 0.0
  %1267 = vmatpush1.msra.mxu0 0.0
  %1268 = vmatprep.subr.mxu0 0.0
  %1269 = vmatpush1.msra.mxu0 0.0
  %1270 = vmatprep.subr.mxu0 0.0
  %1271 = vmatpush1.msra.mxu0 0.0
  %1272 = vmatprep.subr.mxu0 0.0
  %1273 = vmatpush1.msra.mxu0 0.0
  %1274 = vmatprep.subr.mxu0 0.0
  %1275 = vmatpush1.msra.mxu0 0.0
  %1276 = vmatprep.subr.mxu0 0.0
  %1277 = vmatpush1.msra.mxu0 0.0
  %1278 = vmatprep.subr.mxu0 0.0
  %1279 = vmatpush1.msra.mxu0 0.0
  %1280 = vmatprep.subr.mxu0 0.0
  %1281 = vmatpush1.msra.mxu0 0.0
  %1282 = vmatprep.subr.mxu0 0.0
  %1283 = vmatpush1.msra.mxu0 0.0
  %1284 = vmatprep.subr.mxu0 0.0
  %1285 = vmatpush1.msra.mxu0 0.0
  %1286 = vmatprep.subr.mxu0 0.0
  %1287 = vmatpush1.msra.mxu0 0.0
  %1288 = vmatprep.subr.mxu0 0.0
  %1289 = vmatpush1.msra.mxu0 0.0
  %1290 = vmatprep.subr.mxu0 0.0
  %1291 = vmatpush1.msra.mxu0 0.0
  %1292 = vmatprep.subr.mxu0 0.0
  %1293 = vmatpush1.msra.mxu0 0.0
  %1294 = vmatprep.subr.mxu0 0.0
  %1295 = vmatpush1.msra.mxu0 0.0
  %1296 = vmatprep.subr.mxu0 0.0
  %1297 = vmatpush1.msra.mxu0 0.0
  %1298 = vmatprep.subr.mxu0 0.0
  %1299 = vmatpush1.msra.mxu0 0.0
  %1300 = vmatprep.subr.mxu0 0.0
  %1301 = vmatpush1.msra.mxu0 0.0
  %1302 = vmatprep.subr.mxu0 0.0
  %1303 = vmatpush1.msra.mxu0 0.0
  %1304 = vmatprep.subr.mxu0 0.0
  %1305 = vmatpush1.msra.mxu0 0.0
  %1306 = vmatprep.subr.mxu0 0.0
  %1307 = vmatpush1.msra.mxu0 0.0
  %1308 = vmatprep.subr.mxu0 0.0
  %1309 = vmatpush1.msra.mxu0 0.0
  %1310 = vmatprep.subr.mxu0 0.0
  %1311 = vmatpush1.msra.mxu0 0.0
  %1312 = vmatprep.subr.mxu0 0.0
  %1313 = vmatpush1.msra.mxu0 0.0
  %1314 = vmatprep.subr.mxu0 0.0
  %1315 = vmatpush1.msra.mxu0 0.0
  %1316 = vmatprep.subr.mxu0 0.0
  %1317 = vmatpush1.msra.mxu0 0.0
  %1318 = vmatprep.subr.mxu0 0.0
  %1319 = vmatpush1.msra.mxu0 0.0
  %1320 = vmatprep.subr.mxu0 0.0
  %1321 = vmatpush1.msra.mxu0 0.0
  %1322 = vmatprep.mubr.f32.mxu0 0.0
  %1323 = vmatmul.mubr.f32.gmra.mrb[0].mxu0 %v1256
  %v1324 = vpop.f32.mrb[0].mxu0
  %v1325 = vadd.f32 0.0, %v1324
  %v1326 = vpop.f32.mrb[0].mxu0
  %1327 = vdwg.mxu0
  %v1328 = vlaneseq
  %v1329 = vand.u32 %v1328, 127
  %vm1330 = vcmp.lt.s32.totalorder %v1329, 10
  %v1331 = vsel %vm1330, %v1325, -inf
  %1332 = vmax.xlane.f32.xlu0 %v1331
  %v1333 = vpop.xlane.xlu0 %1332
  %v1334 = vsub.f32 %v1331, %v1333
  %v1335 = vmul.f32 %v1334, 1.442695
  %v1336 = vpow.pop %v1335
  %1337 = vadd.xlane.f32.xlu0 %v1336
  %v1338 = vpop.xlane.xlu0 %1337
  %v1339 = vrcp.pop %v1338
  %v1340 = vmul.f32 %v1336, %v1339
  %1341 = vst [vmem:[%s4] sm:$0xff] %v1340
  // Predicated region
  $region18: #{rate_rnn_forward.1} parent=0 // pred_check
    _
  $region19: #{rate_rnn_forward.1} parent=0 // pred_check_branch
    %1343 = sbr.rel (0) target = $region21
  $region20: #{rate_rnn_forward.1} parent=0 // pred_region
    _
  $region21: #{rate_rnn_forward.1} parent=0 // pred_fallthru
    _
  // Predicated region
  $region22: #{rate_rnn_forward.1} parent=0 // pred_check
    _
  $region23: #{rate_rnn_forward.1} parent=0 // pred_check_branch
    %1345 = sbr.rel (0) target = $region25
  $region24: #{rate_rnn_forward.1} parent=0 // pred_region
    _
  $region25: #{rate_rnn_forward.1} parent=0 // pred_fallthru
    _

</llo_original>
